<compile_context>
chip_gen: v5e
topology: v5e:2x2
jax: 0.10.0
libtpu: 0.0.40
codegen_flags: <defaults>
</compile_context>

<pallas_src>
import numpy as np

import jax
import jax.numpy as jnp
from jax import lax
from jax.experimental import pallas as pl
from jax.experimental.pallas import tpu as pltpu

# ---------------------------------------------------------------------------
# Static architecture constants (the module's fc1 = 12*4*4 implies 1x28x28 in).
# ---------------------------------------------------------------------------
_H0 = 28                  # input spatial size, Cin = 1
_K = 5                    # conv kernel size
_C1, _C2 = 6, 12          # conv output channels
_H1 = _H0 - _K + 1        # 24 : conv1 output size
_P1 = _H1 // 2            # 12 : pool1 output size
_H2 = _P1 - _K + 1        # 8  : conv2 output size
_P2 = _H2 // 2            # 4  : pool2 output size
_F1, _F2, _F3 = 120, 60, 10
_LANES = 128              # every feature axis padded to one full lane group


# ---------------------------------------------------------------------------
# Fused kernel: TB images per grid step.
# ---------------------------------------------------------------------------
def _lenet_fused_kernel(x_ref, w1_ref, b1_ref, w2_ref, b2_ref,
                        p1_ref, p2_ref,
                        wfc1_ref, bfc1_ref, wfc2_ref, bfc2_ref,
                        wout_ref, bout_ref,
                        out_ref, z2s_ref):
    f32 = jnp.float32
    cdt = w1_ref.dtype                      # MXU operand dtype (bf16)
    tb = x_ref.shape[0]                     # images in this grid step

    def one_image(i, carry):
        xi = x_ref[i]                                               # (28,28) f32

        # conv1: 5 banded dots; even conv cols -> lanes [0,128), odd -> [128,256)
        y = jnp.dot(xi[0:_H1, :].astype(cdt), w1_ref[0],
                    preferred_element_type=f32)
        for kh in range(1, _K):
            y = y + jnp.dot(xi[kh:kh + _H1, :].astype(cdt), w1_ref[kh],
                            preferred_element_type=f32)
        y = jnp.maximum(y + b1_ref[...], 0.0)                       # bias+relu f32
        cw = jnp.maximum(y[:, :_LANES], y[:, _LANES:]).astype(cdt)  # W-pool (24,128)
        z1 = jnp.maximum(                                           # H-pool (12,128)
            jnp.dot(p1_ref[0], cw, preferred_element_type=f32),
            jnp.dot(p1_ref[1], cw, preferred_element_type=f32))

        # conv2: same banded formulation on the pooled (12, 72->128) layout
        y2 = jnp.dot(z1[0:_H2, :].astype(cdt), w2_ref[0],
                     preferred_element_type=f32)
        for kh in range(1, _K):
            y2 = y2 + jnp.dot(z1[kh:kh + _H2, :].astype(cdt), w2_ref[kh],
                              preferred_element_type=f32)
        y2 = jnp.maximum(y2 + b2_ref[...], 0.0)
        cw2 = jnp.maximum(y2[:, :_LANES], y2[:, _LANES:]).astype(cdt)  # (8,128)
        z2 = jnp.maximum(                                              # (4,128) f32
            jnp.dot(p2_ref[0], cw2, preferred_element_type=f32),
            jnp.dot(p2_ref[1], cw2, preferred_element_type=f32))

        # stage pooled features for the batched FC tail
        for h in range(_P2):
            z2s_ref[h, pl.ds(i, 1), :] = z2[h:h + 1, :].astype(cdt)
        return carry

    lax.fori_loop(0, tb, one_image, 0)

    # ---- batched FC tail: M = TB rows per matmul, one dense (TB,128) store ----
    acc = jnp.dot(z2s_ref[0], wfc1_ref[0], preferred_element_type=f32)
    for h in range(1, _P2):
        acc = acc + jnp.dot(z2s_ref[h], wfc1_ref[h], preferred_element_type=f32)
    h1 = jnp.maximum(acc + bfc1_ref[...], 0.0).astype(cdt)             # (TB,128)
    h2 = jnp.maximum(jnp.dot(h1, wfc2_ref[...], preferred_element_type=f32)
                     + bfc2_ref[...], 0.0).astype(cdt)                 # (TB,128)
    out_ref[0] = (jnp.dot(h2, wout_ref[...], preferred_element_type=f32)
                  + bout_ref[...])                                     # (TB,128)


# ---------------------------------------------------------------------------
# One-time parameter re-layout (PyTorch layout -> fused-kernel layout).
# ---------------------------------------------------------------------------
def prepare_params(params, compute_dtype=jnp.bfloat16):
    """Banded conv weights (even/odd merged, 256 lanes wide), pool selectors,
    permuted/padded fc weights.  Runs once; the jit'd forward does no weight
    math and no re-layout."""
    w1 = np.asarray(params["conv1_w"], np.float32)    # (6, 1, 5, 5)
    b1 = np.asarray(params["conv1_b"], np.float32)
    w2 = np.asarray(params["conv2_w"], np.float32)    # (12, 6, 5, 5)
    b2 = np.asarray(params["conv2_b"], np.float32)
    fc1_w = np.asarray(params["fc1_w"], np.float32)   # (120, 192)
    fc1_b = np.asarray(params["fc1_b"], np.float32)
    fc2_w = np.asarray(params["fc2_w"], np.float32)   # (60, 120)
    fc2_b = np.asarray(params["fc2_b"], np.float32)
    out_w = np.asarray(params["out_w"], np.float32)   # (10, 60)
    out_b = np.asarray(params["out_b"], np.float32)

    def banded_merged(w, b, w_in, in_lanes):
        # Input lane layout: ci*w_in + w.  Output lanes: even conv column 2*pw
        # at co*pw_n+pw, odd conv column 2*pw+1 at 128 + co*pw_n+pw.
        co_n, ci_n, k, _ = w.shape
        pw_n = (w_in - k + 1) // 2
        wm = np.zeros((k, in_lanes, 2 * _LANES), np.float32)
        for kh in range(k):
            for co in range(co_n):
                for ci in range(ci_n):
                    for pw in range(pw_n):
                        for kw in range(k):
                            v = w[co, ci, kh, kw]
                            wm[kh, ci * w_in + 2 * pw + kw, co * pw_n + pw] = v
                            wm[kh, ci * w_in + 2 * pw + 1 + kw,
                               _LANES + co * pw_n + pw] = v
        brow = np.zeros((1, 2 * _LANES), np.float32)
        brow[0, :co_n * pw_n] = np.repeat(b, pw_n)
        brow[0, _LANES:_LANES + co_n * pw_n] = np.repeat(b, pw_n)
        return wm, brow

    w1m, b1row = banded_merged(w1, b1, _H0, _H0)       # (5, 28, 256), (1, 256)
    w2m, b2row = banded_merged(w2, b2, _P1, _LANES)    # (5, 128, 256), (1, 256)

    def pool_sel(rows_out, rows_in):
        sel = np.zeros((2, rows_out, rows_in), np.float32)
        for r in range(rows_out):
            sel[0, r, 2 * r] = 1.0
            sel[1, r, 2 * r + 1] = 1.0
        return sel

    p1 = pool_sel(_P1, _H1)                            # (2, 12, 24)
    p2 = pool_sel(_P2, _H2)                            # (2, 4, 8)

    # fc1 consumes z2 row h (lanes co*4 + w) exactly like PyTorch's NCHW
    # flatten index co*16 + h*4 + w; padded to 128x128 per pooled row.
    wfc1 = np.zeros((_P2, _LANES, _LANES), np.float32)
    for h in range(_P2):
        for co in range(_C2):
            for w_ in range(_P2):
                wfc1[h, co * _P2 + w_, :_F1] = fc1_w[:, co * _P2 * _P2 + h * _P2 + w_]
    bfc1 = np.zeros((1, _LANES), np.float32); bfc1[0, :_F1] = fc1_b
    wfc2 = np.zeros((_LANES, _LANES), np.float32); wfc2[:_F1, :_F2] = fc2_w.T
    bfc2 = np.zeros((1, _LANES), np.float32); bfc2[0, :_F2] = fc2_b
    wout = np.zeros((_LANES, _LANES), np.float32); wout[:_F2, :_F3] = out_w.T
    bout = np.zeros((1, _LANES), np.float32); bout[0, :_F3] = out_b

    mm = lambda a: jnp.asarray(a, compute_dtype)       # MXU operands (bf16)
    fp = lambda a: jnp.asarray(a, jnp.float32)         # f32 epilogue constants
    return dict(w1=mm(w1m), b1=fp(b1row), w2=mm(w2m), b2=fp(b2row),
                p1=mm(p1), p2=mm(p2),
                wfc1=mm(wfc1), bfc1=fp(bfc1),
                wfc2=mm(wfc2), bfc2=fp(bfc2),
                wout=mm(wout), bout=fp(bout))


# ---------------------------------------------------------------------------
# Forward pass: one fused pallas_call, TB images per grid step.
# ---------------------------------------------------------------------------
def network_forward(prep, t_nchw, tb_max=32):
    """t_nchw: (N, 1, 28, 28) float32, same convention as the PyTorch module."""
    n = t_nchw.shape[0]
    cdt = prep["w1"].dtype
    # Batch tile: amortize grid-step overhead over up to tb_max images, but
    # keep >= 2 grid steps whenever N >= 2 so v7x's two TensorCores get work.
    tb = int(max(1, min(tb_max, (n + 1) // 2)))
    g = (n + tb - 1) // tb
    n_pad = g * tb

    x = t_nchw.reshape(n, _H0, _H0).astype(jnp.float32)
    if n_pad != n:
        x = jnp.pad(x, ((0, n_pad - n), (0, 0), (0, 0)))

    flops_per_img = (2 * _K * _H1 * _H0 * 2 * _LANES          # conv1 banded dots
                     + 2 * 2 * _P1 * _H1 * _LANES             # pool1 selects
                     + 2 * _K * _H2 * _LANES * 2 * _LANES     # conv2 banded dots
                     + 2 * 2 * _P2 * _H2 * _LANES             # pool2 selects
                     + 2 * _P2 * _LANES * _LANES              # fc1
                     + 2 * 2 * _LANES * _LANES)               # fc2 + out
    weight_bytes = sum(int(v.size) * v.dtype.itemsize for v in prep.values())
    bytes_accessed = (int(x.size) * 4 + weight_bytes + n_pad * _LANES * 4)

    c2 = lambda i: (0, 0)
    c3 = lambda i: (0, 0, 0)

    out = pl.pallas_call(
        _lenet_fused_kernel,
        out_shape=jax.ShapeDtypeStruct((g, tb, _LANES), jnp.float32),
        grid=(g,),
        in_specs=[
            pl.BlockSpec((tb, _H0, _H0), lambda i: (i, 0, 0)),      # images
            pl.BlockSpec((_K, _H0, 2 * _LANES), c3),                # conv1 banded
            pl.BlockSpec((1, 2 * _LANES), c2),                      # conv1 bias
            pl.BlockSpec((_K, _LANES, 2 * _LANES), c3),             # conv2 banded
            pl.BlockSpec((1, 2 * _LANES), c2),                      # conv2 bias
            pl.BlockSpec((2, _P1, _H1), c3),                        # pool1 selectors
            pl.BlockSpec((2, _P2, _H2), c3),                        # pool2 selectors
            pl.BlockSpec((_P2, _LANES, _LANES), c3),                # fc1 (per row h)
            pl.BlockSpec((1, _LANES), c2),                          # fc1 bias
            pl.BlockSpec((_LANES, _LANES), c2),                     # fc2
            pl.BlockSpec((1, _LANES), c2),                          # fc2 bias
            pl.BlockSpec((_LANES, _LANES), c2),                     # out
            pl.BlockSpec((1, _LANES), c2),                          # out bias
        ],
        out_specs=pl.BlockSpec((1, tb, _LANES), lambda i: (i, 0, 0)),
        scratch_shapes=[pltpu.VMEM((_P2, tb, _LANES), cdt)],
        compiler_params=pltpu.CompilerParams(
            dimension_semantics=("parallel",)),
        cost_estimate=pl.CostEstimate(
            flops=int(n_pad * flops_per_img), transcendentals=0,
            bytes_accessed=int(bytes_accessed)),
    )(x, prep["w1"], prep["b1"], prep["w2"], prep["b2"],
      prep["p1"], prep["p2"],
      prep["wfc1"], prep["bfc1"], prep["wfc2"], prep["bfc2"],
      prep["wout"], prep["bout"])

    return out.reshape(n_pad, _LANES)[:n, :_F3]


# ---------------------------------------------------------------------------
# Parameter init (mirrors PyTorch's default uniform init) + pure-JAX reference.
# ---------------------------------------------------------------------------
def init_params(key):
    ks = jax.random.split(key, 10)

    def u(k_, shape, fan_in):
        bound = 1.0 / np.sqrt(float(fan_in))
        return jax.random.uniform(k_, shape, jnp.float32, -bound, bound)

    return {
        "conv1_w": u(ks[0], (_C1, 1, _K, _K), 1 * _K * _K),
        "conv1_b": u(ks[1], (_C1,), 1 * _K * _K),
        "conv2_w": u(ks[2], (_C2, _C1, _K, _K), _C1 * _K * _K),
        "conv2_b": u(ks[3], (_C2,), _C1 * _K * _K),
        "fc1_w": u(ks[4], (_F1, _C2 * _P2 * _P2), _C2 * _P2 * _P2),
        "fc1_b": u(ks[5], (_F1,), _C2 * _P2 * _P2),
        "fc2_w": u(ks[6], (_F2, _F1), _F1),
        "fc2_b": u(ks[7], (_F2,), _F1),
        "out_w": u(ks[8], (_F3, _F2), _F2),
        "out_b": u(ks[9], (_F3,), _F2),
    }


def reference_forward(params, t_nchw):
    """Plain-XLA f32 reference of the PyTorch forward."""
    hp = jax.lax.Precision.HIGHEST
    y = jax.lax.conv_general_dilated(
        t_nchw, params["conv1_w"], (1, 1), "VALID",
        dimension_numbers=("NCHW", "OIHW", "NCHW"), precision=hp)
    y = jax.nn.relu(y + params["conv1_b"][None, :, None, None])
    y = jax.lax.reduce_window(y, -jnp.inf, jax.lax.max,
                              (1, 1, 2, 2), (1, 1, 2, 2), "VALID")
    y = jax.lax.conv_general_dilated(
        y, params["conv2_w"], (1, 1), "VALID",
        dimension_numbers=("NCHW", "OIHW", "NCHW"), precision=hp)
    y = jax.nn.relu(y + params["conv2_b"][None, :, None, None])
    y = jax.lax.reduce_window(y, -jnp.inf, jax.lax.max,
                              (1, 1, 2, 2), (1, 1, 2, 2), "VALID")
    y = y.reshape(y.shape[0], -1)
    y = jax.nn.relu(jnp.dot(y, params["fc1_w"].T, precision=hp) + params["fc1_b"])
    y = jax.nn.relu(jnp.dot(y, params["fc2_w"].T, precision=hp) + params["fc2_b"])
    return jnp.dot(y, params["out_w"].T, precision=hp) + params["out_b"]


if __name__ == "__main__":
    key = jax.random.PRNGKey(0)
    pkey, xkey, xkey2 = jax.random.split(key, 3)
    params = init_params(pkey)
    prep = prepare_params(params)          # one-time weight re-layout (bf16)

    fwd = jax.jit(network_forward)

    # Small batch at the shape the module implies: (2, 1, 28, 28).
    x_small = jax.random.normal(xkey, (2, 1, _H0, _H0), jnp.float32)
    y_small = fwd(prep, x_small)
    jax.block_until_ready(y_small)
    assert y_small.shape == (2, _F3) and y_small.dtype == jnp.float32

    # Larger, non-tile-multiple batch exercises the TB>1 batched path + padding.
    x_big = jax.random.normal(xkey2, (67, 1, _H0, _H0), jnp.float32)
    y_big = fwd(prep, x_big)
    jax.block_until_ready(y_big)
    assert y_big.shape == (67, _F3)

    # Correctness vs. the plain-XLA f32 reference.  Tolerance covers the bf16
    # quantization of MXU weights/activation slabs (epilogues are f32).
    ref_small = reference_forward(params, x_small)
    ref_big = reference_forward(params, x_big)
    assert jnp.allclose(y_small, ref_small, rtol=5e-2, atol=5e-2), \
        float(jnp.max(jnp.abs(y_small - ref_small)))
    assert jnp.allclose(y_big, ref_big, rtol=5e-2, atol=5e-2), \
        float(jnp.max(jnp.abs(y_big - ref_big)))
    print("KERNEL_OK")
</pallas_src>

<mosaic_0001>
module attributes {stable_mosaic.version = 11 : i64} {
  func.func @_lenet_fused_kernel(%arg0: i32, %arg1: memref<1x28x28xf32, #tpu.memory_space<vmem>>, %arg2: memref<5x28x256xbf16, #tpu.memory_space<vmem>>, %arg3: memref<1x256xf32, #tpu.memory_space<vmem>>, %arg4: memref<5x128x256xbf16, #tpu.memory_space<vmem>>, %arg5: memref<1x256xf32, #tpu.memory_space<vmem>>, %arg6: memref<2x12x24xbf16, #tpu.memory_space<vmem>>, %arg7: memref<2x4x8xbf16, #tpu.memory_space<vmem>>, %arg8: memref<4x128x128xbf16, #tpu.memory_space<vmem>>, %arg9: memref<1x128xf32, #tpu.memory_space<vmem>>, %arg10: memref<128x128xbf16, #tpu.memory_space<vmem>>, %arg11: memref<1x128xf32, #tpu.memory_space<vmem>>, %arg12: memref<128x128xbf16, #tpu.memory_space<vmem>>, %arg13: memref<1x128xf32, #tpu.memory_space<vmem>>, %arg14: memref<1x1x128xf32, #tpu.memory_space<vmem>>, %arg15: memref<4x1x128xbf16, #tpu.memory_space<vmem>>) attributes {dimension_semantics = [#tpu.dimension_semantics<parallel>], iteration_bounds = array<i64: 2>, scalar_prefetch = 0 : i64, scratch_operands = 1 : i64, tpu.core_type = #tpu.core_type<tc>, window_params = [{transform_indices = @transform_0, window_bounds = array<i64: 1, 28, 28>}, {pipeline_mode = #tpu.pipeline_mode<synchronous>, transform_indices = @transform_1, window_bounds = array<i64: 5, 28, 256>}, {pipeline_mode = #tpu.pipeline_mode<synchronous>, transform_indices = @transform_2, window_bounds = array<i64: 1, 256>}, {pipeline_mode = #tpu.pipeline_mode<synchronous>, transform_indices = @transform_3, window_bounds = array<i64: 5, 128, 256>}, {pipeline_mode = #tpu.pipeline_mode<synchronous>, transform_indices = @transform_4, window_bounds = array<i64: 1, 256>}, {pipeline_mode = #tpu.pipeline_mode<synchronous>, transform_indices = @transform_5, window_bounds = array<i64: 2, 12, 24>}, {pipeline_mode = #tpu.pipeline_mode<synchronous>, transform_indices = @transform_6, window_bounds = array<i64: 2, 4, 8>}, {pipeline_mode = #tpu.pipeline_mode<synchronous>, transform_indices = @transform_7, window_bounds = array<i64: 4, 128, 128>}, {pipeline_mode = #tpu.pipeline_mode<synchronous>, transform_indices = @transform_8, window_bounds = array<i64: 1, 128>}, {pipeline_mode = #tpu.pipeline_mode<synchronous>, transform_indices = @transform_9, window_bounds = array<i64: 128, 128>}, {pipeline_mode = #tpu.pipeline_mode<synchronous>, transform_indices = @transform_10, window_bounds = array<i64: 1, 128>}, {pipeline_mode = #tpu.pipeline_mode<synchronous>, transform_indices = @transform_11, window_bounds = array<i64: 128, 128>}, {pipeline_mode = #tpu.pipeline_mode<synchronous>, transform_indices = @transform_12, window_bounds = array<i64: 1, 128>}, {transform_indices = @transform_13, window_bounds = array<i64: 1, 1, 128>}]} {
    %c0_i32 = arith.constant 0 : i32
    %0 = arith.index_cast %c0_i32 : i32 to index
    %c0 = arith.constant 0 : index
    %c0_0 = arith.constant 0 : index
    %1 = vector.load %arg1[%0, %c0, %c0_0] : memref<1x28x28xf32, #tpu.memory_space<vmem>>, vector<1x28x28xf32>
    %2 = vector.shape_cast %1 : vector<1x28x28xf32> to vector<28x28xf32>
    %3 = vector.extract_strided_slice %2 {offsets = [0, 0], sizes = [24, 28], strides = [1, 1]} : vector<28x28xf32> to vector<24x28xf32>
    %4 = arith.truncf %3 : vector<24x28xf32> to vector<24x28xbf16>
    %c0_1 = arith.constant 0 : index
    %c0_2 = arith.constant 0 : index
    %c0_3 = arith.constant 0 : index
    %5 = vector.load %arg2[%c0_1, %c0_2, %c0_3] : memref<5x28x256xbf16, #tpu.memory_space<vmem>>, vector<1x28x256xbf16>
    %6 = vector.shape_cast %5 : vector<1x28x256xbf16> to vector<28x256xbf16>
    %cst = arith.constant dense<0.000000e+00> : vector<24x256xf32>
    %7 = tpu.matmul %4, %6, %cst {dimension_numbers = #tpu.dot_dimension_numbers<[1], [0], [0], [1], [0, 0, 1, 1], [], []>} : vector<24x28xbf16>, vector<28x256xbf16>, vector<24x256xf32> -> vector<24x256xf32>
    %8 = vector.extract_strided_slice %2 {offsets = [1, 0], sizes = [24, 28], strides = [1, 1]} : vector<28x28xf32> to vector<24x28xf32>
    %9 = arith.truncf %8 : vector<24x28xf32> to vector<24x28xbf16>
    %c1 = arith.constant 1 : index
    %c0_4 = arith.constant 0 : index
    %c0_5 = arith.constant 0 : index
    %10 = vector.load %arg2[%c1, %c0_4, %c0_5] : memref<5x28x256xbf16, #tpu.memory_space<vmem>>, vector<1x28x256xbf16>
    %11 = vector.shape_cast %10 : vector<1x28x256xbf16> to vector<28x256xbf16>
    %cst_6 = arith.constant dense<0.000000e+00> : vector<24x256xf32>
    %12 = tpu.matmul %9, %11, %cst_6 {dimension_numbers = #tpu.dot_dimension_numbers<[1], [0], [0], [1], [0, 0, 1, 1], [], []>} : vector<24x28xbf16>, vector<28x256xbf16>, vector<24x256xf32> -> vector<24x256xf32>
    %13 = arith.addf %7, %12 : vector<24x256xf32>
    %14 = vector.extract_strided_slice %2 {offsets = [2, 0], sizes = [24, 28], strides = [1, 1]} : vector<28x28xf32> to vector<24x28xf32>
    %15 = arith.truncf %14 : vector<24x28xf32> to vector<24x28xbf16>
    %c2 = arith.constant 2 : index
    %c0_7 = arith.constant 0 : index
    %c0_8 = arith.constant 0 : index
    %16 = vector.load %arg2[%c2, %c0_7, %c0_8] : memref<5x28x256xbf16, #tpu.memory_space<vmem>>, vector<1x28x256xbf16>
    %17 = vector.shape_cast %16 : vector<1x28x256xbf16> to vector<28x256xbf16>
    %cst_9 = arith.constant dense<0.000000e+00> : vector<24x256xf32>
    %18 = tpu.matmul %15, %17, %cst_9 {dimension_numbers = #tpu.dot_dimension_numbers<[1], [0], [0], [1], [0, 0, 1, 1], [], []>} : vector<24x28xbf16>, vector<28x256xbf16>, vector<24x256xf32> -> vector<24x256xf32>
    %19 = arith.addf %13, %18 : vector<24x256xf32>
    %20 = vector.extract_strided_slice %2 {offsets = [3, 0], sizes = [24, 28], strides = [1, 1]} : vector<28x28xf32> to vector<24x28xf32>
    %21 = arith.truncf %20 : vector<24x28xf32> to vector<24x28xbf16>
    %c3 = arith.constant 3 : index
    %c0_10 = arith.constant 0 : index
    %c0_11 = arith.constant 0 : index
    %22 = vector.load %arg2[%c3, %c0_10, %c0_11] : memref<5x28x256xbf16, #tpu.memory_space<vmem>>, vector<1x28x256xbf16>
    %23 = vector.shape_cast %22 : vector<1x28x256xbf16> to vector<28x256xbf16>
    %cst_12 = arith.constant dense<0.000000e+00> : vector<24x256xf32>
    %24 = tpu.matmul %21, %23, %cst_12 {dimension_numbers = #tpu.dot_dimension_numbers<[1], [0], [0], [1], [0, 0, 1, 1], [], []>} : vector<24x28xbf16>, vector<28x256xbf16>, vector<24x256xf32> -> vector<24x256xf32>
    %25 = arith.addf %19, %24 : vector<24x256xf32>
    %26 = vector.extract_strided_slice %2 {offsets = [4, 0], sizes = [24, 28], strides = [1, 1]} : vector<28x28xf32> to vector<24x28xf32>
    %27 = arith.truncf %26 : vector<24x28xf32> to vector<24x28xbf16>
    %c4 = arith.constant 4 : index
    %c0_13 = arith.constant 0 : index
    %c0_14 = arith.constant 0 : index
    %28 = vector.load %arg2[%c4, %c0_13, %c0_14] : memref<5x28x256xbf16, #tpu.memory_space<vmem>>, vector<1x28x256xbf16>
    %29 = vector.shape_cast %28 : vector<1x28x256xbf16> to vector<28x256xbf16>
    %cst_15 = arith.constant dense<0.000000e+00> : vector<24x256xf32>
    %30 = tpu.matmul %27, %29, %cst_15 {dimension_numbers = #tpu.dot_dimension_numbers<[1], [0], [0], [1], [0, 0, 1, 1], [], []>} : vector<24x28xbf16>, vector<28x256xbf16>, vector<24x256xf32> -> vector<24x256xf32>
    %31 = arith.addf %25, %30 : vector<24x256xf32>
    %c0_16 = arith.constant 0 : index
    %c0_17 = arith.constant 0 : index
    %32 = vector.load %arg3[%c0_16, %c0_17] : memref<1x256xf32, #tpu.memory_space<vmem>>, vector<1x256xf32>
    %33 = vector.broadcast %32 : vector<1x256xf32> to vector<24x256xf32>
    %34 = arith.addf %31, %33 : vector<24x256xf32>
    %cst_18 = arith.constant 0.000000e+00 : f32
    %35 = vector.broadcast %cst_18 : f32 to vector<24x256xf32>
    %36 = arith.maximumf %34, %35 : vector<24x256xf32>
    %37 = vector.extract_strided_slice %36 {offsets = [0, 0], sizes = [24, 128], strides = [1, 1]} : vector<24x256xf32> to vector<24x128xf32>
    %38 = vector.extract_strided_slice %36 {offsets = [0, 128], sizes = [24, 128], strides = [1, 1]} : vector<24x256xf32> to vector<24x128xf32>
    %39 = arith.maximumf %37, %38 : vector<24x128xf32>
    %40 = arith.truncf %39 : vector<24x128xf32> to vector<24x128xbf16>
    %c0_19 = arith.constant 0 : index
    %c0_20 = arith.constant 0 : index
    %c0_21 = arith.constant 0 : index
    %41 = vector.load %arg6[%c0_19, %c0_20, %c0_21] : memref<2x12x24xbf16, #tpu.memory_space<vmem>>, vector<1x12x24xbf16>
    %42 = vector.shape_cast %41 : vector<1x12x24xbf16> to vector<12x24xbf16>
    %cst_22 = arith.constant dense<0.000000e+00> : vector<12x128xf32>
    %43 = tpu.matmul %42, %40, %cst_22 {dimension_numbers = #tpu.dot_dimension_numbers<[1], [0], [0], [1], [0, 0, 1, 1], [], []>} : vector<12x24xbf16>, vector<24x128xbf16>, vector<12x128xf32> -> vector<12x128xf32>
    %c1_23 = arith.constant 1 : index
    %c0_24 = arith.constant 0 : index
    %c0_25 = arith.constant 0 : index
    %44 = vector.load %arg6[%c1_23, %c0_24, %c0_25] : memref<2x12x24xbf16, #tpu.memory_space<vmem>>, vector<1x12x24xbf16>
    %45 = vector.shape_cast %44 : vector<1x12x24xbf16> to vector<12x24xbf16>
    %cst_26 = arith.constant dense<0.000000e+00> : vector<12x128xf32>
    %46 = tpu.matmul %45, %40, %cst_26 {dimension_numbers = #tpu.dot_dimension_numbers<[1], [0], [0], [1], [0, 0, 1, 1], [], []>} : vector<12x24xbf16>, vector<24x128xbf16>, vector<12x128xf32> -> vector<12x128xf32>
    %47 = arith.maximumf %43, %46 : vector<12x128xf32>
    %48 = vector.extract_strided_slice %47 {offsets = [0, 0], sizes = [8, 128], strides = [1, 1]} : vector<12x128xf32> to vector<8x128xf32>
    %49 = arith.truncf %48 : vector<8x128xf32> to vector<8x128xbf16>
    %c0_27 = arith.constant 0 : index
    %c0_28 = arith.constant 0 : index
    %c0_29 = arith.constant 0 : index
    %50 = vector.load %arg4[%c0_27, %c0_28, %c0_29] : memref<5x128x256xbf16, #tpu.memory_space<vmem>>, vector<1x128x256xbf16>
    %51 = vector.shape_cast %50 : vector<1x128x256xbf16> to vector<128x256xbf16>
    %cst_30 = arith.constant dense<0.000000e+00> : vector<8x256xf32>
    %52 = tpu.matmul %49, %51, %cst_30 {dimension_numbers = #tpu.dot_dimension_numbers<[1], [0], [0], [1], [0, 0, 1, 1], [], []>} : vector<8x128xbf16>, vector<128x256xbf16>, vector<8x256xf32> -> vector<8x256xf32>
    %53 = vector.extract_strided_slice %47 {offsets = [1, 0], sizes = [8, 128], strides = [1, 1]} : vector<12x128xf32> to vector<8x128xf32>
    %54 = arith.truncf %53 : vector<8x128xf32> to vector<8x128xbf16>
    %c1_31 = arith.constant 1 : index
    %c0_32 = arith.constant 0 : index
    %c0_33 = arith.constant 0 : index
    %55 = vector.load %arg4[%c1_31, %c0_32, %c0_33] : memref<5x128x256xbf16, #tpu.memory_space<vmem>>, vector<1x128x256xbf16>
    %56 = vector.shape_cast %55 : vector<1x128x256xbf16> to vector<128x256xbf16>
    %cst_34 = arith.constant dense<0.000000e+00> : vector<8x256xf32>
    %57 = tpu.matmul %54, %56, %cst_34 {dimension_numbers = #tpu.dot_dimension_numbers<[1], [0], [0], [1], [0, 0, 1, 1], [], []>} : vector<8x128xbf16>, vector<128x256xbf16>, vector<8x256xf32> -> vector<8x256xf32>
    %58 = arith.addf %52, %57 : vector<8x256xf32>
    %59 = vector.extract_strided_slice %47 {offsets = [2, 0], sizes = [8, 128], strides = [1, 1]} : vector<12x128xf32> to vector<8x128xf32>
    %60 = arith.truncf %59 : vector<8x128xf32> to vector<8x128xbf16>
    %c2_35 = arith.constant 2 : index
    %c0_36 = arith.constant 0 : index
    %c0_37 = arith.constant 0 : index
    %61 = vector.load %arg4[%c2_35, %c0_36, %c0_37] : memref<5x128x256xbf16, #tpu.memory_space<vmem>>, vector<1x128x256xbf16>
    %62 = vector.shape_cast %61 : vector<1x128x256xbf16> to vector<128x256xbf16>
    %cst_38 = arith.constant dense<0.000000e+00> : vector<8x256xf32>
    %63 = tpu.matmul %60, %62, %cst_38 {dimension_numbers = #tpu.dot_dimension_numbers<[1], [0], [0], [1], [0, 0, 1, 1], [], []>} : vector<8x128xbf16>, vector<128x256xbf16>, vector<8x256xf32> -> vector<8x256xf32>
    %64 = arith.addf %58, %63 : vector<8x256xf32>
    %65 = vector.extract_strided_slice %47 {offsets = [3, 0], sizes = [8, 128], strides = [1, 1]} : vector<12x128xf32> to vector<8x128xf32>
    %66 = arith.truncf %65 : vector<8x128xf32> to vector<8x128xbf16>
    %c3_39 = arith.constant 3 : index
    %c0_40 = arith.constant 0 : index
    %c0_41 = arith.constant 0 : index
    %67 = vector.load %arg4[%c3_39, %c0_40, %c0_41] : memref<5x128x256xbf16, #tpu.memory_space<vmem>>, vector<1x128x256xbf16>
    %68 = vector.shape_cast %67 : vector<1x128x256xbf16> to vector<128x256xbf16>
    %cst_42 = arith.constant dense<0.000000e+00> : vector<8x256xf32>
    %69 = tpu.matmul %66, %68, %cst_42 {dimension_numbers = #tpu.dot_dimension_numbers<[1], [0], [0], [1], [0, 0, 1, 1], [], []>} : vector<8x128xbf16>, vector<128x256xbf16>, vector<8x256xf32> -> vector<8x256xf32>
    %70 = arith.addf %64, %69 : vector<8x256xf32>
    %71 = vector.extract_strided_slice %47 {offsets = [4, 0], sizes = [8, 128], strides = [1, 1]} : vector<12x128xf32> to vector<8x128xf32>
    %72 = arith.truncf %71 : vector<8x128xf32> to vector<8x128xbf16>
    %c4_43 = arith.constant 4 : index
    %c0_44 = arith.constant 0 : index
    %c0_45 = arith.constant 0 : index
    %73 = vector.load %arg4[%c4_43, %c0_44, %c0_45] : memref<5x128x256xbf16, #tpu.memory_space<vmem>>, vector<1x128x256xbf16>
    %74 = vector.shape_cast %73 : vector<1x128x256xbf16> to vector<128x256xbf16>
    %cst_46 = arith.constant dense<0.000000e+00> : vector<8x256xf32>
    %75 = tpu.matmul %72, %74, %cst_46 {dimension_numbers = #tpu.dot_dimension_numbers<[1], [0], [0], [1], [0, 0, 1, 1], [], []>} : vector<8x128xbf16>, vector<128x256xbf16>, vector<8x256xf32> -> vector<8x256xf32>
    %76 = arith.addf %70, %75 : vector<8x256xf32>
    %c0_47 = arith.constant 0 : index
    %c0_48 = arith.constant 0 : index
    %77 = vector.load %arg5[%c0_47, %c0_48] : memref<1x256xf32, #tpu.memory_space<vmem>>, vector<1x256xf32>
    %78 = vector.broadcast %77 : vector<1x256xf32> to vector<8x256xf32>
    %79 = arith.addf %76, %78 : vector<8x256xf32>
    %cst_49 = arith.constant 0.000000e+00 : f32
    %80 = vector.broadcast %cst_49 : f32 to vector<8x256xf32>
    %81 = arith.maximumf %79, %80 : vector<8x256xf32>
    %82 = vector.extract_strided_slice %81 {offsets = [0, 0], sizes = [8, 128], strides = [1, 1]} : vector<8x256xf32> to vector<8x128xf32>
    %83 = vector.extract_strided_slice %81 {offsets = [0, 128], sizes = [8, 128], strides = [1, 1]} : vector<8x256xf32> to vector<8x128xf32>
    %84 = arith.maximumf %82, %83 : vector<8x128xf32>
    %85 = arith.truncf %84 : vector<8x128xf32> to vector<8x128xbf16>
    %c0_50 = arith.constant 0 : index
    %c0_51 = arith.constant 0 : index
    %c0_52 = arith.constant 0 : index
    %86 = vector.load %arg7[%c0_50, %c0_51, %c0_52] : memref<2x4x8xbf16, #tpu.memory_space<vmem>>, vector<1x4x8xbf16>
    %87 = vector.shape_cast %86 : vector<1x4x8xbf16> to vector<4x8xbf16>
    %cst_53 = arith.constant dense<0.000000e+00> : vector<4x128xf32>
    %88 = tpu.matmul %87, %85, %cst_53 {dimension_numbers = #tpu.dot_dimension_numbers<[1], [0], [0], [1], [0, 0, 1, 1], [], []>} : vector<4x8xbf16>, vector<8x128xbf16>, vector<4x128xf32> -> vector<4x128xf32>
    %c1_54 = arith.constant 1 : index
    %c0_55 = arith.constant 0 : index
    %c0_56 = arith.constant 0 : index
    %89 = vector.load %arg7[%c1_54, %c0_55, %c0_56] : memref<2x4x8xbf16, #tpu.memory_space<vmem>>, vector<1x4x8xbf16>
    %90 = vector.shape_cast %89 : vector<1x4x8xbf16> to vector<4x8xbf16>
    %cst_57 = arith.constant dense<0.000000e+00> : vector<4x128xf32>
    %91 = tpu.matmul %90, %85, %cst_57 {dimension_numbers = #tpu.dot_dimension_numbers<[1], [0], [0], [1], [0, 0, 1, 1], [], []>} : vector<4x8xbf16>, vector<8x128xbf16>, vector<4x128xf32> -> vector<4x128xf32>
    %92 = arith.maximumf %88, %91 : vector<4x128xf32>
    %93 = vector.extract_strided_slice %92 {offsets = [0, 0], sizes = [1, 128], strides = [1, 1]} : vector<4x128xf32> to vector<1x128xf32>
    %94 = arith.truncf %93 : vector<1x128xf32> to vector<1x128xbf16>
    %c0_58 = arith.constant 0 : index
    %95 = arith.index_cast %c0_i32 : i32 to index
    %c0_59 = arith.constant 0 : index
    %96 = vector.load %arg15[%c0_58, %95, %c0_59] : memref<4x1x128xbf16, #tpu.memory_space<vmem>>, vector<1x1x128xbf16>
    %97 = vector.shape_cast %96 : vector<1x1x128xbf16> to vector<1x128xbf16>
    %98 = vector.shape_cast %94 : vector<1x128xbf16> to vector<1x1x128xbf16>
    tpu.vector_store %arg15[%c0_58, %95, %c0_59], %98 {strides = array<i32>} : memref<4x1x128xbf16, #tpu.memory_space<vmem>>, vector<1x1x128xbf16>,
    %99 = vector.extract_strided_slice %92 {offsets = [1, 0], sizes = [1, 128], strides = [1, 1]} : vector<4x128xf32> to vector<1x128xf32>
    %100 = arith.truncf %99 : vector<1x128xf32> to vector<1x128xbf16>
    %c1_60 = arith.constant 1 : index
    %101 = arith.index_cast %c0_i32 : i32 to index
    %c0_61 = arith.constant 0 : index
    %102 = vector.load %arg15[%c1_60, %101, %c0_61] : memref<4x1x128xbf16, #tpu.memory_space<vmem>>, vector<1x1x128xbf16>
    %103 = vector.shape_cast %102 : vector<1x1x128xbf16> to vector<1x128xbf16>
    %104 = vector.shape_cast %100 : vector<1x128xbf16> to vector<1x1x128xbf16>
    tpu.vector_store %arg15[%c1_60, %101, %c0_61], %104 {strides = array<i32>} : memref<4x1x128xbf16, #tpu.memory_space<vmem>>, vector<1x1x128xbf16>,
    %105 = vector.extract_strided_slice %92 {offsets = [2, 0], sizes = [1, 128], strides = [1, 1]} : vector<4x128xf32> to vector<1x128xf32>
    %106 = arith.truncf %105 : vector<1x128xf32> to vector<1x128xbf16>
    %c2_62 = arith.constant 2 : index
    %107 = arith.index_cast %c0_i32 : i32 to index
    %c0_63 = arith.constant 0 : index
    %108 = vector.load %arg15[%c2_62, %107, %c0_63] : memref<4x1x128xbf16, #tpu.memory_space<vmem>>, vector<1x1x128xbf16>
    %109 = vector.shape_cast %108 : vector<1x1x128xbf16> to vector<1x128xbf16>
    %110 = vector.shape_cast %106 : vector<1x128xbf16> to vector<1x1x128xbf16>
    tpu.vector_store %arg15[%c2_62, %107, %c0_63], %110 {strides = array<i32>} : memref<4x1x128xbf16, #tpu.memory_space<vmem>>, vector<1x1x128xbf16>,
    %111 = vector.extract_strided_slice %92 {offsets = [3, 0], sizes = [1, 128], strides = [1, 1]} : vector<4x128xf32> to vector<1x128xf32>
    %112 = arith.truncf %111 : vector<1x128xf32> to vector<1x128xbf16>
    %c3_64 = arith.constant 3 : index
    %113 = arith.index_cast %c0_i32 : i32 to index
    %c0_65 = arith.constant 0 : index
    %114 = vector.load %arg15[%c3_64, %113, %c0_65] : memref<4x1x128xbf16, #tpu.memory_space<vmem>>, vector<1x1x128xbf16>
    %115 = vector.shape_cast %114 : vector<1x1x128xbf16> to vector<1x128xbf16>
    %116 = vector.shape_cast %112 : vector<1x128xbf16> to vector<1x1x128xbf16>
    tpu.vector_store %arg15[%c3_64, %113, %c0_65], %116 {strides = array<i32>} : memref<4x1x128xbf16, #tpu.memory_space<vmem>>, vector<1x1x128xbf16>,
    %c1_i32 = arith.constant 1 : i32
    %c0_66 = arith.constant 0 : index
    %c0_67 = arith.constant 0 : index
    %c0_68 = arith.constant 0 : index
    %117 = vector.load %arg15[%c0_66, %c0_67, %c0_68] : memref<4x1x128xbf16, #tpu.memory_space<vmem>>, vector<1x1x128xbf16>
    %118 = vector.shape_cast %117 : vector<1x1x128xbf16> to vector<1x128xbf16>
    %c0_69 = arith.constant 0 : index
    %c0_70 = arith.constant 0 : index
    %c0_71 = arith.constant 0 : index
    %119 = vector.load %arg8[%c0_69, %c0_70, %c0_71] : memref<4x128x128xbf16, #tpu.memory_space<vmem>>, vector<1x128x128xbf16>
    %120 = vector.shape_cast %119 : vector<1x128x128xbf16> to vector<128x128xbf16>
    %cst_72 = arith.constant dense<0.000000e+00> : vector<1x128xf32>
    %121 = tpu.matmul %118, %120, %cst_72 {dimension_numbers = #tpu.dot_dimension_numbers<[1], [0], [0], [1], [0, 0, 1, 1], [], []>} : vector<1x128xbf16>, vector<128x128xbf16>, vector<1x128xf32> -> vector<1x128xf32>
    %c1_73 = arith.constant 1 : index
    %c0_74 = arith.constant 0 : index
    %c0_75 = arith.constant 0 : index
    %122 = vector.load %arg15[%c1_73, %c0_74, %c0_75] : memref<4x1x128xbf16, #tpu.memory_space<vmem>>, vector<1x1x128xbf16>
    %123 = vector.shape_cast %122 : vector<1x1x128xbf16> to vector<1x128xbf16>
    %c1_76 = arith.constant 1 : index
    %c0_77 = arith.constant 0 : index
    %c0_78 = arith.constant 0 : index
    %124 = vector.load %arg8[%c1_76, %c0_77, %c0_78] : memref<4x128x128xbf16, #tpu.memory_space<vmem>>, vector<1x128x128xbf16>
    %125 = vector.shape_cast %124 : vector<1x128x128xbf16> to vector<128x128xbf16>
    %cst_79 = arith.constant dense<0.000000e+00> : vector<1x128xf32>
    %126 = tpu.matmul %123, %125, %cst_79 {dimension_numbers = #tpu.dot_dimension_numbers<[1], [0], [0], [1], [0, 0, 1, 1], [], []>} : vector<1x128xbf16>, vector<128x128xbf16>, vector<1x128xf32> -> vector<1x128xf32>
    %127 = arith.addf %121, %126 : vector<1x128xf32>
    %c2_80 = arith.constant 2 : index
    %c0_81 = arith.constant 0 : index
    %c0_82 = arith.constant 0 : index
    %128 = vector.load %arg15[%c2_80, %c0_81, %c0_82] : memref<4x1x128xbf16, #tpu.memory_space<vmem>>, vector<1x1x128xbf16>
    %129 = vector.shape_cast %128 : vector<1x1x128xbf16> to vector<1x128xbf16>
    %c2_83 = arith.constant 2 : index
    %c0_84 = arith.constant 0 : index
    %c0_85 = arith.constant 0 : index
    %130 = vector.load %arg8[%c2_83, %c0_84, %c0_85] : memref<4x128x128xbf16, #tpu.memory_space<vmem>>, vector<1x128x128xbf16>
    %131 = vector.shape_cast %130 : vector<1x128x128xbf16> to vector<128x128xbf16>
    %cst_86 = arith.constant dense<0.000000e+00> : vector<1x128xf32>
    %132 = tpu.matmul %129, %131, %cst_86 {dimension_numbers = #tpu.dot_dimension_numbers<[1], [0], [0], [1], [0, 0, 1, 1], [], []>} : vector<1x128xbf16>, vector<128x128xbf16>, vector<1x128xf32> -> vector<1x128xf32>
    %133 = arith.addf %127, %132 : vector<1x128xf32>
    %c3_87 = arith.constant 3 : index
    %c0_88 = arith.constant 0 : index
    %c0_89 = arith.constant 0 : index
    %134 = vector.load %arg15[%c3_87, %c0_88, %c0_89] : memref<4x1x128xbf16, #tpu.memory_space<vmem>>, vector<1x1x128xbf16>
    %135 = vector.shape_cast %134 : vector<1x1x128xbf16> to vector<1x128xbf16>
    %c3_90 = arith.constant 3 : index
    %c0_91 = arith.constant 0 : index
    %c0_92 = arith.constant 0 : index
    %136 = vector.load %arg8[%c3_90, %c0_91, %c0_92] : memref<4x128x128xbf16, #tpu.memory_space<vmem>>, vector<1x128x128xbf16>
    %137 = vector.shape_cast %136 : vector<1x128x128xbf16> to vector<128x128xbf16>
    %cst_93 = arith.constant dense<0.000000e+00> : vector<1x128xf32>
    %138 = tpu.matmul %135, %137, %cst_93 {dimension_numbers = #tpu.dot_dimension_numbers<[1], [0], [0], [1], [0, 0, 1, 1], [], []>} : vector<1x128xbf16>, vector<128x128xbf16>, vector<1x128xf32> -> vector<1x128xf32>
    %139 = arith.addf %133, %138 : vector<1x128xf32>
    %c0_94 = arith.constant 0 : index
    %c0_95 = arith.constant 0 : index
    %140 = vector.load %arg9[%c0_94, %c0_95] : memref<1x128xf32, #tpu.memory_space<vmem>>, vector<1x128xf32>
    %141 = arith.addf %139, %140 : vector<1x128xf32>
    %cst_96 = arith.constant 0.000000e+00 : f32
    %142 = vector.broadcast %cst_96 : f32 to vector<1x128xf32>
    %143 = arith.maximumf %141, %142 : vector<1x128xf32>
    %144 = arith.truncf %143 : vector<1x128xf32> to vector<1x128xbf16>
    %c0_97 = arith.constant 0 : index
    %c0_98 = arith.constant 0 : index
    %145 = vector.load %arg10[%c0_97, %c0_98] : memref<128x128xbf16, #tpu.memory_space<vmem>>, vector<128x128xbf16>
    %cst_99 = arith.constant dense<0.000000e+00> : vector<1x128xf32>
    %146 = tpu.matmul %144, %145, %cst_99 {dimension_numbers = #tpu.dot_dimension_numbers<[1], [0], [0], [1], [0, 0, 1, 1], [], []>} : vector<1x128xbf16>, vector<128x128xbf16>, vector<1x128xf32> -> vector<1x128xf32>
    %c0_100 = arith.constant 0 : index
    %c0_101 = arith.constant 0 : index
    %147 = vector.load %arg11[%c0_100, %c0_101] : memref<1x128xf32, #tpu.memory_space<vmem>>, vector<1x128xf32>
    %148 = arith.addf %146, %147 : vector<1x128xf32>
    %cst_102 = arith.constant 0.000000e+00 : f32
    %149 = vector.broadcast %cst_102 : f32 to vector<1x128xf32>
    %150 = arith.maximumf %148, %149 : vector<1x128xf32>
    %151 = arith.truncf %150 : vector<1x128xf32> to vector<1x128xbf16>
    %c0_103 = arith.constant 0 : index
    %c0_104 = arith.constant 0 : index
    %152 = vector.load %arg12[%c0_103, %c0_104] : memref<128x128xbf16, #tpu.memory_space<vmem>>, vector<128x128xbf16>
    %cst_105 = arith.constant dense<0.000000e+00> : vector<1x128xf32>
    %153 = tpu.matmul %151, %152, %cst_105 {dimension_numbers = #tpu.dot_dimension_numbers<[1], [0], [0], [1], [0, 0, 1, 1], [], []>} : vector<1x128xbf16>, vector<128x128xbf16>, vector<1x128xf32> -> vector<1x128xf32>
    %c0_106 = arith.constant 0 : index
    %c0_107 = arith.constant 0 : index
    %154 = vector.load %arg13[%c0_106, %c0_107] : memref<1x128xf32, #tpu.memory_space<vmem>>, vector<1x128xf32>
    %155 = arith.addf %153, %154 : vector<1x128xf32>
    %c0_108 = arith.constant 0 : index
    %c0_109 = arith.constant 0 : index
    %c0_110 = arith.constant 0 : index
    %156 = vector.load %arg14[%c0_108, %c0_109, %c0_110] : memref<1x1x128xf32, #tpu.memory_space<vmem>>, vector<1x1x128xf32>
    %157 = vector.shape_cast %156 : vector<1x1x128xf32> to vector<1x128xf32>
    %158 = vector.shape_cast %155 : vector<1x128xf32> to vector<1x1x128xf32>
    tpu.vector_store %arg14[%c0_108, %c0_109, %c0_110], %158 {strides = array<i32>} : memref<1x1x128xf32, #tpu.memory_space<vmem>>, vector<1x1x128xf32>,
    return
  }
  func.func @transform_0(%arg0: i32) -> (i32, i32, i32) {
    %c0_i32 = arith.constant 0 : i32
    %c0_i32_0 = arith.constant 0 : i32
    %c0_i32_1 = arith.constant 0 : i32
    return %arg0, %c0_i32, %c0_i32_0 : i32, i32, i32
  }
  func.func @transform_1(%arg0: i32) -> (i32, i32, i32) {
    %c0_i32 = arith.constant 0 : i32
    %c0_i32_0 = arith.constant 0 : i32
    %c0_i32_1 = arith.constant 0 : i32
    %c0_i32_2 = arith.constant 0 : i32
    return %c0_i32, %c0_i32_0, %c0_i32_1 : i32, i32, i32
  }
  func.func @transform_2(%arg0: i32) -> (i32, i32) {
    %c0_i32 = arith.constant 0 : i32
    %c0_i32_0 = arith.constant 0 : i32
    %c0_i32_1 = arith.constant 0 : i32
    return %c0_i32, %c0_i32_0 : i32, i32
  }
  func.func @transform_3(%arg0: i32) -> (i32, i32, i32) {
    %c0_i32 = arith.constant 0 : i32
    %c0_i32_0 = arith.constant 0 : i32
    %c0_i32_1 = arith.constant 0 : i32
    %c0_i32_2 = arith.constant 0 : i32
    return %c0_i32, %c0_i32_0, %c0_i32_1 : i32, i32, i32
  }
  func.func @transform_4(%arg0: i32) -> (i32, i32) {
    %c0_i32 = arith.constant 0 : i32
    %c0_i32_0 = arith.constant 0 : i32
    %c0_i32_1 = arith.constant 0 : i32
    return %c0_i32, %c0_i32_0 : i32, i32
  }
  func.func @transform_5(%arg0: i32) -> (i32, i32, i32) {
    %c0_i32 = arith.constant 0 : i32
    %c0_i32_0 = arith.constant 0 : i32
    %c0_i32_1 = arith.constant 0 : i32
    %c0_i32_2 = arith.constant 0 : i32
    return %c0_i32, %c0_i32_0, %c0_i32_1 : i32, i32, i32
  }
  func.func @transform_6(%arg0: i32) -> (i32, i32, i32) {
    %c0_i32 = arith.constant 0 : i32
    %c0_i32_0 = arith.constant 0 : i32
    %c0_i32_1 = arith.constant 0 : i32
    %c0_i32_2 = arith.constant 0 : i32
    return %c0_i32, %c0_i32_0, %c0_i32_1 : i32, i32, i32
  }
  func.func @transform_7(%arg0: i32) -> (i32, i32, i32) {
    %c0_i32 = arith.constant 0 : i32
    %c0_i32_0 = arith.constant 0 : i32
    %c0_i32_1 = arith.constant 0 : i32
    %c0_i32_2 = arith.constant 0 : i32
    return %c0_i32, %c0_i32_0, %c0_i32_1 : i32, i32, i32
  }
  func.func @transform_8(%arg0: i32) -> (i32, i32) {
    %c0_i32 = arith.constant 0 : i32
    %c0_i32_0 = arith.constant 0 : i32
    %c0_i32_1 = arith.constant 0 : i32
    return %c0_i32, %c0_i32_0 : i32, i32
  }
  func.func @transform_9(%arg0: i32) -> (i32, i32) {
    %c0_i32 = arith.constant 0 : i32
    %c0_i32_0 = arith.constant 0 : i32
    %c0_i32_1 = arith.constant 0 : i32
    return %c0_i32, %c0_i32_0 : i32, i32
  }
  func.func @transform_10(%arg0: i32) -> (i32, i32) {
    %c0_i32 = arith.constant 0 : i32
    %c0_i32_0 = arith.constant 0 : i32
    %c0_i32_1 = arith.constant 0 : i32
    return %c0_i32, %c0_i32_0 : i32, i32
  }
  func.func @transform_11(%arg0: i32) -> (i32, i32) {
    %c0_i32 = arith.constant 0 : i32
    %c0_i32_0 = arith.constant 0 : i32
    %c0_i32_1 = arith.constant 0 : i32
    return %c0_i32, %c0_i32_0 : i32, i32
  }
  func.func @transform_12(%arg0: i32) -> (i32, i32) {
    %c0_i32 = arith.constant 0 : i32
    %c0_i32_0 = arith.constant 0 : i32
    %c0_i32_1 = arith.constant 0 : i32
    return %c0_i32, %c0_i32_0 : i32, i32
  }
  func.func @transform_13(%arg0: i32) -> (i32, i32, i32) {
    %c0_i32 = arith.constant 0 : i32
    %c0_i32_0 = arith.constant 0 : i32
    %c0_i32_1 = arith.constant 0 : i32
    return %arg0, %c0_i32, %c0_i32_0 : i32, i32, i32
  }
}

</mosaic_0001>

<llo_original>
// kernel: network_forward.1
$region0: #{network_forward.1}
  #allocation0 [shape = 'u32[]', space=smem, size = 0x4, offset = 0x4, fixed_abs, tag = 'smem constant byte address 0x4 - core index']
  #allocation1 [shape = 'u32[72,128]{1,0:T(1,128)}', space=vmem, size = 0x9000, scoped, tag = 'internal scratch']
  #allocation2 [shape = 'bf16[4,1,128]{2,1,0:T(2,128)(2,1)}', space=vmem, size = 0x800, scoped, tag = 'scratch operand']
  %s0 = inlined_call_operand.vmem [shape: f32[2,28,28], index: 0, kind: input, shape index: {}]
  %s1 = inlined_call_operand.hbm [shape: bf16[5,28,256], index: 1, kind: input, shape index: {}]
  %s2 = inlined_call_operand.hbm [shape: f32[1,256], index: 2, kind: input, shape index: {}]
  %s3 = inlined_call_operand.hbm [shape: bf16[5,128,256], index: 3, kind: input, shape index: {}]
  %s4 = inlined_call_operand.hbm [shape: f32[1,256], index: 4, kind: input, shape index: {}]
  %s5 = inlined_call_operand.vmem [shape: bf16[2,12,24], index: 5, kind: input, shape index: {}]
  %s6 = inlined_call_operand.hbm [shape: bf16[2,4,8], index: 6, kind: input, shape index: {}]
  %s7 = inlined_call_operand.vmem [shape: bf16[4,128,128], index: 7, kind: input, shape index: {}]
  %s8 = inlined_call_operand.hbm [shape: f32[1,128], index: 8, kind: input, shape index: {}]
  %s9 = inlined_call_operand.hbm [shape: bf16[128,128], index: 9, kind: input, shape index: {}]
  %s10 = inlined_call_operand.hbm [shape: f32[1,128], index: 10, kind: input, shape index: {}]
  %s11 = inlined_call_operand.hbm [shape: bf16[128,128], index: 11, kind: input, shape index: {}]
  %s12 = inlined_call_operand.hbm [shape: f32[1,128], index: 12, kind: input, shape index: {}]
  %s13 = inlined_call_operand.hbm [shape: f32[2,1,128], index: 13, kind: output, shape index: {}]
  %s14 = sld [smem:[#allocation0]]
  $region125: #{network_forward.1} parent=0
    _
  %s16 = ssub.s32 1, %s14
  %s17 = scalar_select 0, %s16, %s14
  $region1: #{network_forward.1} parent=0
    #allocation3 [shape = 'u8[81920]{0}', space=vmem, size = 0x14000, scoped, tag = 'input window, operand 1, single buffered']
    #allocation4 [shape = 's32[2]{0}', space=sflag, size = 0x8, scoped, tag = 'scoped memory for network_forward.1']
    #allocation5 [shape = 's32[2]{0}', space=sflag, size = 0x8, scoped, tag = 'scoped memory for network_forward.1']
    #allocation6 [shape = 'u8[1024]{0}', space=vmem, size = 0x400, scoped, tag = 'input window, operand 2, single buffered']
    #allocation7 [shape = 's32[1]{0}', space=sflag, size = 0x4, scoped, tag = 'scoped memory for network_forward.1']
    #allocation8 [shape = 'u8[327680]{0}', space=vmem, size = 0x50000, scoped, tag = 'input window, operand 3, single buffered']
    #allocation9 [shape = 'u8[1024]{0}', space=vmem, size = 0x400, scoped, tag = 'input window, operand 4, single buffered']
    #allocation10 [shape = 's32[1]{0}', space=sflag, size = 0x4, scoped, tag = 'scoped memory for network_forward.1']
    #allocation11 [shape = 'u8[2048]{0}', space=vmem, size = 0x800, scoped, tag = 'input window, operand 6, single buffered']
    #allocation12 [shape = 'u8[512]{0}', space=vmem, size = 0x400, scoped, tag = 'input window, operand 8, single buffered']
    #allocation13 [shape = 's32[1]{0}', space=sflag, size = 0x4, scoped, tag = 'scoped memory for network_forward.1']
    #allocation14 [shape = 'u8[32768]{0}', space=vmem, size = 0x8000, scoped, tag = 'input window, operand 9, single buffered']
    #allocation15 [shape = 'u8[512]{0}', space=vmem, size = 0x400, scoped, tag = 'input window, operand 10, single buffered']
    #allocation16 [shape = 's32[1]{0}', space=sflag, size = 0x4, scoped, tag = 'scoped memory for network_forward.1']
    #allocation17 [shape = 'u8[32768]{0}', space=vmem, size = 0x8000, scoped, tag = 'input window, operand 11, single buffered']
    #allocation18 [shape = 'u8[512]{0}', space=vmem, size = 0x400, scoped, tag = 'input window, operand 12, single buffered']
    #allocation19 [shape = 's32[1]{0}', space=sflag, size = 0x4, scoped, tag = 'scoped memory for network_forward.1']
    #allocation20 [shape = 'u8[1024]{0}', space=vmem, size = 0x400, scoped, tag = 'output window, operand 0']
    %18 = vsyncpa [#allocation4], 0
    %19 = vsyncpa [#allocation7], 0
    %20 = vsyncpa [#allocation10], 0
    %21 = vsyncpa [#allocation13], 0
    %22 = vsyncpa [#allocation16], 0
    %23 = vsyncpa [#allocation19], 0
    %24 = vsyncpa [#allocation5], 0
    %s25 = scalar_lea.sflag [#allocation5], 1
    %26 = vsyncpa %s25, 0
    loop: start=0, step=1, limit=4
    $region2: #{network_forward.1} parent=1 // loop_pre_header
      _
    $region3: #{network_forward.1} parent=1 // loop_header
      %s28 = sphi 0, %s32
      %p29 = scmp.ge.s32.totalorder %s28, 4
      %s38 = sphi 0, %s40
      %s41 = sphi 0, %s38
      %s42 = sphi 0, %s41
      %s58 = sphi 0, %s42
      %s62 = sphi 0, %s62
      %s64 = sphi 0, %s62
      %s65 = sphi 0, %s64
      %s79 = sphi 0, %s65
      %s83 = sphi 0, %s83
      %s85 = sphi 0, %s83
      %s86 = sphi 0, %s85
      %s100 = sphi 0, %s86
      %s104 = sphi 0, %s104
      %s106 = sphi 0, %s104
      %s107 = sphi 0, %s106
      %s121 = sphi 0, %s107
      %s125 = sphi 0, %s125
      %s127 = sphi 0, %s125
      %s128 = sphi 0, %s127
      %s142 = sphi 0, %s128
      %s146 = sphi 0, %s146
      %s148 = sphi 0, %s146
      %s149 = sphi 0, %s148
      %s163 = sphi 0, %s149
      %s167 = sphi 0, %s167
      %s169 = sphi 0, %s167
      %s170 = sphi 0, %s169
      %s184 = sphi 0, %s170
      %s188 = sphi 0, %s188
      %s190 = sphi 0, %s188
      %s191 = sphi 0, %s190
      %s205 = sphi 0, %s191
      %s209 = sphi 0, %s209
      %s211 = sphi 0, %s209
      %s212 = sphi 0, %s211
      %s226 = sphi 0, %s212
      %s230 = sphi 0, %s230
      %s232 = sphi 0, %s230
      %s233 = sphi 0, %s232
      %s247 = sphi 0, %s233
      %s251 = sphi 0, %s251
      %s253 = sphi 0, %s251
      %s254 = sphi 0, %s253
      %s268 = sphi 0, %s254
      %s272 = sphi 0, %s272
      %s274 = sphi 0, %s272
      %s275 = sphi 0, %s274
      %s289 = sphi 0, %s275
      %s293 = sphi 0, %s293
      %s295 = sphi 0, %s293
      %s296 = sphi 0, %s295
      %s310 = sphi 0, %s296
      %s316 = sphi 0, %s318
      %s319 = sphi 0, %s316
      %s320 = sphi 0, %s319
      %s336 = sphi 0, %s320
    $region4: #{network_forward.1} parent=1 // loop_header_branch
      %31 = sbr.rel (%p29) target = $region8
    $region5: #{network_forward.1} parent=1 // loop_body
      %s33 = ssub.s32 %s28, 1
      %s34 = ssub.s32 %s28, 2
      %s35 = sadd.s32 %s28, 1
      %s36 = ssub.s32 %s28, %s35
      %p37 = scmp.eq.s32.totalorder %s36, 0
      %s39 = sadd.s32 %s38, 1
      %s40 = scalar_select %p37, %s38, %s39
      %p43 = pneg %p37
      %p44 = scmp.eq.s32.totalorder %s28, 1
      %p45 = por %p43, %p44
      %p46 = scmp.ne.s32.totalorder %s38, %s41
      %p47 = scmp.eq.s32.totalorder %s28, 0
      %p48 = por %p46, %p47
      %p49 = scmp.ne.s32.totalorder %s38, %s41
      %p50 = scmp.eq.s32.totalorder %s33, 1
      %p51 = por %p49, %p50
      %p52 = scmp.ne.s32.totalorder %s41, %s42
      %p53 = scmp.eq.s32.totalorder %s33, 0
      %p54 = por %p52, %p53
      %p55 = scmp.ne.s32.totalorder %s41, %s42
      %p56 = scmp.eq.s32.totalorder %s34, 1
      %p57 = por %p55, %p56
      %p59 = scmp.ne.s32.totalorder %s42, %s58
      %p60 = scmp.eq.s32.totalorder %s34, 0
      %p61 = por %p59, %p60
      %s63 = sadd.s32 %s62, 1
      %p66 = scmp.eq.s32.totalorder %s28, 1
      %p67 = scmp.ne.s32.totalorder %s62, %s64
      %p68 = scmp.eq.s32.totalorder %s28, 0
      %p69 = por %p67, %p68
      %p70 = scmp.ne.s32.totalorder %s62, %s64
      %p71 = scmp.eq.s32.totalorder %s33, 1
      %p72 = por %p70, %p71
      %p73 = scmp.ne.s32.totalorder %s64, %s65
      %p74 = scmp.eq.s32.totalorder %s33, 0
      %p75 = por %p73, %p74
      %p76 = scmp.ne.s32.totalorder %s64, %s65
      %p77 = scmp.eq.s32.totalorder %s34, 1
      %p78 = por %p76, %p77
      %p80 = scmp.ne.s32.totalorder %s65, %s79
      %p81 = scmp.eq.s32.totalorder %s34, 0
      %p82 = por %p80, %p81
      %s84 = sadd.s32 %s83, 1
      %p87 = scmp.eq.s32.totalorder %s28, 1
      %p88 = scmp.ne.s32.totalorder %s83, %s85
      %p89 = scmp.eq.s32.totalorder %s28, 0
      %p90 = por %p88, %p89
      %p91 = scmp.ne.s32.totalorder %s83, %s85
      %p92 = scmp.eq.s32.totalorder %s33, 1
      %p93 = por %p91, %p92
      %p94 = scmp.ne.s32.totalorder %s85, %s86
      %p95 = scmp.eq.s32.totalorder %s33, 0
      %p96 = por %p94, %p95
      %p97 = scmp.ne.s32.totalorder %s85, %s86
      %p98 = scmp.eq.s32.totalorder %s34, 1
      %p99 = por %p97, %p98
      %p101 = scmp.ne.s32.totalorder %s86, %s100
      %p102 = scmp.eq.s32.totalorder %s34, 0
      %p103 = por %p101, %p102
      %s105 = sadd.s32 %s104, 1
      %p108 = scmp.eq.s32.totalorder %s28, 1
      %p109 = scmp.ne.s32.totalorder %s104, %s106
      %p110 = scmp.eq.s32.totalorder %s28, 0
      %p111 = por %p109, %p110
      %p112 = scmp.ne.s32.totalorder %s104, %s106
      %p113 = scmp.eq.s32.totalorder %s33, 1
      %p114 = por %p112, %p113
      %p115 = scmp.ne.s32.totalorder %s106, %s107
      %p116 = scmp.eq.s32.totalorder %s33, 0
      %p117 = por %p115, %p116
      %p118 = scmp.ne.s32.totalorder %s106, %s107
      %p119 = scmp.eq.s32.totalorder %s34, 1
      %p120 = por %p118, %p119
      %p122 = scmp.ne.s32.totalorder %s107, %s121
      %p123 = scmp.eq.s32.totalorder %s34, 0
      %p124 = por %p122, %p123
      %s126 = sadd.s32 %s125, 1
      %p129 = scmp.eq.s32.totalorder %s28, 1
      %p130 = scmp.ne.s32.totalorder %s125, %s127
      %p131 = scmp.eq.s32.totalorder %s28, 0
      %p132 = por %p130, %p131
      %p133 = scmp.ne.s32.totalorder %s125, %s127
      %p134 = scmp.eq.s32.totalorder %s33, 1
      %p135 = por %p133, %p134
      %p136 = scmp.ne.s32.totalorder %s127, %s128
      %p137 = scmp.eq.s32.totalorder %s33, 0
      %p138 = por %p136, %p137
      %p139 = scmp.ne.s32.totalorder %s127, %s128
      %p140 = scmp.eq.s32.totalorder %s34, 1
      %p141 = por %p139, %p140
      %p143 = scmp.ne.s32.totalorder %s128, %s142
      %p144 = scmp.eq.s32.totalorder %s34, 0
      %p145 = por %p143, %p144
      %s147 = sadd.s32 %s146, 1
      %p150 = scmp.eq.s32.totalorder %s28, 1
      %p151 = scmp.ne.s32.totalorder %s146, %s148
      %p152 = scmp.eq.s32.totalorder %s28, 0
      %p153 = por %p151, %p152
      %p154 = scmp.ne.s32.totalorder %s146, %s148
      %p155 = scmp.eq.s32.totalorder %s33, 1
      %p156 = por %p154, %p155
      %p157 = scmp.ne.s32.totalorder %s148, %s149
      %p158 = scmp.eq.s32.totalorder %s33, 0
      %p159 = por %p157, %p158
      %p160 = scmp.ne.s32.totalorder %s148, %s149
      %p161 = scmp.eq.s32.totalorder %s34, 1
      %p162 = por %p160, %p161
      %p164 = scmp.ne.s32.totalorder %s149, %s163
      %p165 = scmp.eq.s32.totalorder %s34, 0
      %p166 = por %p164, %p165
      %s168 = sadd.s32 %s167, 1
      %p171 = scmp.eq.s32.totalorder %s28, 1
      %p172 = scmp.ne.s32.totalorder %s167, %s169
      %p173 = scmp.eq.s32.totalorder %s28, 0
      %p174 = por %p172, %p173
      %p175 = scmp.ne.s32.totalorder %s167, %s169
      %p176 = scmp.eq.s32.totalorder %s33, 1
      %p177 = por %p175, %p176
      %p178 = scmp.ne.s32.totalorder %s169, %s170
      %p179 = scmp.eq.s32.totalorder %s33, 0
      %p180 = por %p178, %p179
      %p181 = scmp.ne.s32.totalorder %s169, %s170
      %p182 = scmp.eq.s32.totalorder %s34, 1
      %p183 = por %p181, %p182
      %p185 = scmp.ne.s32.totalorder %s170, %s184
      %p186 = scmp.eq.s32.totalorder %s34, 0
      %p187 = por %p185, %p186
      %s189 = sadd.s32 %s188, 1
      %p192 = scmp.eq.s32.totalorder %s28, 1
      %p193 = scmp.ne.s32.totalorder %s188, %s190
      %p194 = scmp.eq.s32.totalorder %s28, 0
      %p195 = por %p193, %p194
      %p196 = scmp.ne.s32.totalorder %s188, %s190
      %p197 = scmp.eq.s32.totalorder %s33, 1
      %p198 = por %p196, %p197
      %p199 = scmp.ne.s32.totalorder %s190, %s191
      %p200 = scmp.eq.s32.totalorder %s33, 0
      %p201 = por %p199, %p200
      %p202 = scmp.ne.s32.totalorder %s190, %s191
      %p203 = scmp.eq.s32.totalorder %s34, 1
      %p204 = por %p202, %p203
      %p206 = scmp.ne.s32.totalorder %s191, %s205
      %p207 = scmp.eq.s32.totalorder %s34, 0
      %p208 = por %p206, %p207
      %s210 = sadd.s32 %s209, 1
      %p213 = scmp.eq.s32.totalorder %s28, 1
      %p214 = scmp.ne.s32.totalorder %s209, %s211
      %p215 = scmp.eq.s32.totalorder %s28, 0
      %p216 = por %p214, %p215
      %p217 = scmp.ne.s32.totalorder %s209, %s211
      %p218 = scmp.eq.s32.totalorder %s33, 1
      %p219 = por %p217, %p218
      %p220 = scmp.ne.s32.totalorder %s211, %s212
      %p221 = scmp.eq.s32.totalorder %s33, 0
      %p222 = por %p220, %p221
      %p223 = scmp.ne.s32.totalorder %s211, %s212
      %p224 = scmp.eq.s32.totalorder %s34, 1
      %p225 = por %p223, %p224
      %p227 = scmp.ne.s32.totalorder %s212, %s226
      %p228 = scmp.eq.s32.totalorder %s34, 0
      %p229 = por %p227, %p228
      %s231 = sadd.s32 %s230, 1
      %p234 = scmp.eq.s32.totalorder %s28, 1
      %p235 = scmp.ne.s32.totalorder %s230, %s232
      %p236 = scmp.eq.s32.totalorder %s28, 0
      %p237 = por %p235, %p236
      %p238 = scmp.ne.s32.totalorder %s230, %s232
      %p239 = scmp.eq.s32.totalorder %s33, 1
      %p240 = por %p238, %p239
      %p241 = scmp.ne.s32.totalorder %s232, %s233
      %p242 = scmp.eq.s32.totalorder %s33, 0
      %p243 = por %p241, %p242
      %p244 = scmp.ne.s32.totalorder %s232, %s233
      %p245 = scmp.eq.s32.totalorder %s34, 1
      %p246 = por %p244, %p245
      %p248 = scmp.ne.s32.totalorder %s233, %s247
      %p249 = scmp.eq.s32.totalorder %s34, 0
      %p250 = por %p248, %p249
      %s252 = sadd.s32 %s251, 1
      %p255 = scmp.eq.s32.totalorder %s28, 1
      %p256 = scmp.ne.s32.totalorder %s251, %s253
      %p257 = scmp.eq.s32.totalorder %s28, 0
      %p258 = por %p256, %p257
      %p259 = scmp.ne.s32.totalorder %s251, %s253
      %p260 = scmp.eq.s32.totalorder %s33, 1
      %p261 = por %p259, %p260
      %p262 = scmp.ne.s32.totalorder %s253, %s254
      %p263 = scmp.eq.s32.totalorder %s33, 0
      %p264 = por %p262, %p263
      %p265 = scmp.ne.s32.totalorder %s253, %s254
      %p266 = scmp.eq.s32.totalorder %s34, 1
      %p267 = por %p265, %p266
      %p269 = scmp.ne.s32.totalorder %s254, %s268
      %p270 = scmp.eq.s32.totalorder %s34, 0
      %p271 = por %p269, %p270
      %s273 = sadd.s32 %s272, 1
      %p276 = scmp.eq.s32.totalorder %s28, 1
      %p277 = scmp.ne.s32.totalorder %s272, %s274
      %p278 = scmp.eq.s32.totalorder %s28, 0
      %p279 = por %p277, %p278
      %p280 = scmp.ne.s32.totalorder %s272, %s274
      %p281 = scmp.eq.s32.totalorder %s33, 1
      %p282 = por %p280, %p281
      %p283 = scmp.ne.s32.totalorder %s274, %s275
      %p284 = scmp.eq.s32.totalorder %s33, 0
      %p285 = por %p283, %p284
      %p286 = scmp.ne.s32.totalorder %s274, %s275
      %p287 = scmp.eq.s32.totalorder %s34, 1
      %p288 = por %p286, %p287
      %p290 = scmp.ne.s32.totalorder %s275, %s289
      %p291 = scmp.eq.s32.totalorder %s34, 0
      %p292 = por %p290, %p291
      %s294 = sadd.s32 %s293, 1
      %p297 = scmp.eq.s32.totalorder %s28, 1
      %p298 = scmp.ne.s32.totalorder %s293, %s295
      %p299 = scmp.eq.s32.totalorder %s28, 0
      %p300 = por %p298, %p299
      %p301 = scmp.ne.s32.totalorder %s293, %s295
      %p302 = scmp.eq.s32.totalorder %s33, 1
      %p303 = por %p301, %p302
      %p304 = scmp.ne.s32.totalorder %s295, %s296
      %p305 = scmp.eq.s32.totalorder %s33, 0
      %p306 = por %p304, %p305
      %p307 = scmp.ne.s32.totalorder %s295, %s296
      %p308 = scmp.eq.s32.totalorder %s34, 1
      %p309 = por %p307, %p308
      %p311 = scmp.ne.s32.totalorder %s296, %s310
      %p312 = scmp.eq.s32.totalorder %s34, 0
      %p313 = por %p311, %p312
      %s314 = ssub.s32 %s28, %s35
      %p315 = scmp.eq.s32.totalorder %s314, 0
      %s317 = sadd.s32 %s316, 1
      %s318 = scalar_select %p315, %s316, %s317
      %p321 = pneg %p315
      %p322 = scmp.eq.s32.totalorder %s28, 1
      %p323 = por %p321, %p322
      %p324 = scmp.ne.s32.totalorder %s316, %s319
      %p325 = scmp.eq.s32.totalorder %s28, 0
      %p326 = por %p324, %p325
      %p327 = scmp.ne.s32.totalorder %s316, %s319
      %p328 = scmp.eq.s32.totalorder %s33, 1
      %p329 = por %p327, %p328
      %p330 = scmp.ne.s32.totalorder %s319, %s320
      %p331 = scmp.eq.s32.totalorder %s33, 0
      %p332 = por %p330, %p331
      %p333 = scmp.ne.s32.totalorder %s319, %s320
      %p334 = scmp.eq.s32.totalorder %s34, 1
      %p335 = por %p333, %p334
      %p337 = scmp.ne.s32.totalorder %s320, %s336
      %p338 = scmp.eq.s32.totalorder %s34, 0
      %p339 = por %p337, %p338
      %p340 = scmp.le.s32.totalorder 1, %s28
      %p341 = scmp.lt.s32.totalorder %s28, 3
      %p342 = pnand %p340, %p341
      %p343 = pneg %p342
      // Predicated region
      $region9: #{network_forward.1} parent=5 // pred_check
        _
      $region10: #{network_forward.1} parent=5 // pred_check_branch
        %345 = sbr.rel (%p342) target = $region12
      $region11: #{network_forward.1} parent=5 // pred_region
        %s346 = ssub.s32 %s28, 1
        // Predicated region
        $region13: #{network_forward.1} parent=11 // pred_check
          %p347 = pneg %p75
        $region14: #{network_forward.1} parent=11 // pred_check_branch
          %349 = sbr.rel (%p347) target = $region16
        $region15: #{network_forward.1} parent=11 // pred_region
          %351 = vsyncadd [#allocation4], 0
          %s352 = sshll.u32 %s1, 4
          %s353 = int_to_ptr.hbm [resolvable:$true] %s352
          %s354 = sshll.u32 [#allocation3], 4
          %s355 = int_to_ptr.vmem [resolvable:$true] %s354
          %360 = dma.hbm_to_vmem [thread:$0]  %s353, 2560, %s355, [#allocation4], 128, 128, 8
        $region16: #{network_forward.1} parent=11 // pred_fallthru
          _
        // Predicated region
        $region17: #{network_forward.1} parent=11 // pred_check
          %p361 = pneg %p96
        $region18: #{network_forward.1} parent=11 // pred_check_branch
          %363 = sbr.rel (%p361) target = $region20
        $region19: #{network_forward.1} parent=11 // pred_region
          %365 = vsyncadd [#allocation7], 0
          %s367 = sshll.u32 %s2, 4
          %s368 = int_to_ptr.hbm [resolvable:$true] %s367
          %s369 = sshll.u32 [#allocation6], 4
          %s370 = int_to_ptr.vmem [resolvable:$true] %s369
          %372 = dma.hbm_to_vmem [thread:$0]  %s368, 32, %s370, [#allocation7]
        $region20: #{network_forward.1} parent=11 // pred_fallthru
          _
        // Predicated region
        $region21: #{network_forward.1} parent=11 // pred_check
          %p373 = pneg %p117
        $region22: #{network_forward.1} parent=11 // pred_check_branch
          %375 = sbr.rel (%p373) target = $region24
        $region23: #{network_forward.1} parent=11 // pred_region
          %377 = vsyncadd [#allocation7], 0
          %s378 = sshll.u32 %s3, 4
          %s379 = int_to_ptr.hbm [resolvable:$true] %s378
          %s380 = sshll.u32 [#allocation8], 4
          %s381 = int_to_ptr.vmem [resolvable:$true] %s380
          %386 = dma.hbm_to_vmem [thread:$0]  %s379, 10240, %s381, [#allocation7], 128, 128, 8
        $region24: #{network_forward.1} parent=11 // pred_fallthru
          _
        // Predicated region
        $region25: #{network_forward.1} parent=11 // pred_check
          %p387 = pneg %p138
        $region26: #{network_forward.1} parent=11 // pred_check_branch
          %389 = sbr.rel (%p387) target = $region28
        $region27: #{network_forward.1} parent=11 // pred_region
          %391 = vsyncadd [#allocation10], 0
          %s393 = sshll.u32 %s4, 4
          %s394 = int_to_ptr.hbm [resolvable:$true] %s393
          %s395 = sshll.u32 [#allocation9], 4
          %s396 = int_to_ptr.vmem [resolvable:$true] %s395
          %398 = dma.hbm_to_vmem [thread:$0]  %s394, 32, %s396, [#allocation10]
        $region28: #{network_forward.1} parent=11 // pred_fallthru
          _
        // Predicated region
        $region29: #{network_forward.1} parent=11 // pred_check
          %p399 = pneg %p159
        $region30: #{network_forward.1} parent=11 // pred_check_branch
          %401 = sbr.rel (%p399) target = $region32
        $region31: #{network_forward.1} parent=11 // pred_region
          _
        $region32: #{network_forward.1} parent=11 // pred_fallthru
          _
        // Predicated region
        $region33: #{network_forward.1} parent=11 // pred_check
          %p402 = pneg %p180
        $region34: #{network_forward.1} parent=11 // pred_check_branch
          %404 = sbr.rel (%p402) target = $region36
        $region35: #{network_forward.1} parent=11 // pred_region
          %406 = vsyncadd [#allocation10], 0
          %s407 = sshll.u32 %s6, 4
          %s408 = int_to_ptr.hbm [resolvable:$true] %s407
          %s409 = sshll.u32 [#allocation11], 4
          %s410 = int_to_ptr.vmem [resolvable:$true] %s409
          %415 = dma.hbm_to_vmem [thread:$0]  %s408, 64, %s410, [#allocation10], 32, 32, 2
        $region36: #{network_forward.1} parent=11 // pred_fallthru
          _
        // Predicated region
        $region37: #{network_forward.1} parent=11 // pred_check
          %p416 = pneg %p201
        $region38: #{network_forward.1} parent=11 // pred_check_branch
          %418 = sbr.rel (%p416) target = $region40
        $region39: #{network_forward.1} parent=11 // pred_region
          _
        $region40: #{network_forward.1} parent=11 // pred_fallthru
          _
        // Predicated region
        $region41: #{network_forward.1} parent=11 // pred_check
          %p419 = pneg %p222
        $region42: #{network_forward.1} parent=11 // pred_check_branch
          %421 = sbr.rel (%p419) target = $region44
        $region43: #{network_forward.1} parent=11 // pred_region
          %423 = vsyncadd [#allocation13], 0
          %s425 = sshll.u32 %s8, 4
          %s426 = int_to_ptr.hbm [resolvable:$true] %s425
          %s427 = sshll.u32 [#allocation12], 4
          %s428 = int_to_ptr.vmem [resolvable:$true] %s427
          %430 = dma.hbm_to_vmem [thread:$0]  %s426, 16, %s428, [#allocation13]
        $region44: #{network_forward.1} parent=11 // pred_fallthru
          _
        // Predicated region
        $region45: #{network_forward.1} parent=11 // pred_check
          %p431 = pneg %p243
        $region46: #{network_forward.1} parent=11 // pred_check_branch
          %433 = sbr.rel (%p431) target = $region48
        $region47: #{network_forward.1} parent=11 // pred_region
          %435 = vsyncadd [#allocation13], 0
          %s436 = sshll.u32 %s9, 4
          %s437 = int_to_ptr.hbm [resolvable:$true] %s436
          %s438 = sshll.u32 [#allocation14], 4
          %s439 = int_to_ptr.vmem [resolvable:$true] %s438
          %444 = dma.hbm_to_vmem [thread:$0]  %s437, 1024, %s439, [#allocation13], 64, 64, 4
        $region48: #{network_forward.1} parent=11 // pred_fallthru
          _
        // Predicated region
        $region49: #{network_forward.1} parent=11 // pred_check
          %p445 = pneg %p264
        $region50: #{network_forward.1} parent=11 // pred_check_branch
          %447 = sbr.rel (%p445) target = $region52
        $region51: #{network_forward.1} parent=11 // pred_region
          %449 = vsyncadd [#allocation16], 0
          %s451 = sshll.u32 %s10, 4
          %s452 = int_to_ptr.hbm [resolvable:$true] %s451
          %s453 = sshll.u32 [#allocation15], 4
          %s454 = int_to_ptr.vmem [resolvable:$true] %s453
          %456 = dma.hbm_to_vmem [thread:$0]  %s452, 16, %s454, [#allocation16]
        $region52: #{network_forward.1} parent=11 // pred_fallthru
          _
        // Predicated region
        $region53: #{network_forward.1} parent=11 // pred_check
          %p457 = pneg %p285
        $region54: #{network_forward.1} parent=11 // pred_check_branch
          %459 = sbr.rel (%p457) target = $region56
        $region55: #{network_forward.1} parent=11 // pred_region
          %461 = vsyncadd [#allocation16], 0
          %s462 = sshll.u32 %s11, 4
          %s463 = int_to_ptr.hbm [resolvable:$true] %s462
          %s464 = sshll.u32 [#allocation17], 4
          %s465 = int_to_ptr.vmem [resolvable:$true] %s464
          %470 = dma.hbm_to_vmem [thread:$0]  %s463, 1024, %s465, [#allocation16], 64, 64, 4
        $region56: #{network_forward.1} parent=11 // pred_fallthru
          _
        // Predicated region
        $region57: #{network_forward.1} parent=11 // pred_check
          %p471 = pneg %p306
        $region58: #{network_forward.1} parent=11 // pred_check_branch
          %473 = sbr.rel (%p471) target = $region60
        $region59: #{network_forward.1} parent=11 // pred_region
          %475 = vsyncadd [#allocation19], 0
          %s477 = sshll.u32 %s12, 4
          %s478 = int_to_ptr.hbm [resolvable:$true] %s477
          %s479 = sshll.u32 [#allocation18], 4
          %s480 = int_to_ptr.vmem [resolvable:$true] %s479
          %482 = dma.hbm_to_vmem [thread:$0]  %s478, 16, %s480, [#allocation19]
        $region60: #{network_forward.1} parent=11 // pred_fallthru
          _
      $region12: #{network_forward.1} parent=5 // pred_fallthru
        _
      %p483 = scmp.lt.s32.totalorder %s28, 2
      // Predicated region
      $region61: #{network_forward.1} parent=5 // pred_check
        %p484 = pneg %p483
      $region62: #{network_forward.1} parent=5 // pred_check_branch
        %486 = sbr.rel (%p484) target = $region64
      $region63: #{network_forward.1} parent=5 // pred_region
        // Predicated region
        $region65: #{network_forward.1} parent=63 // pred_check
          %p487 = pneg %p48
        $region66: #{network_forward.1} parent=63 // pred_check_branch
          %489 = sbr.rel (%p487) target = $region68
        $region67: #{network_forward.1} parent=63 // pred_region
          %p490 = scmp.lt.s32.totalorder %s28, 1
          %s491 = scalar_select %p490, %s28, 1
          %s492 = smul.addr %s491, 4
          %s493 = smul.addr %s492, 8
          %s494 = scalar_lea.vmem %s0, %s493
        $region68: #{network_forward.1} parent=63 // pred_fallthru
          _
      $region64: #{network_forward.1} parent=5 // pred_fallthru
        _
      %p495 = scmp.le.s32.totalorder 1, %s28
      %p496 = scmp.lt.s32.totalorder %s28, 3
      %p497 = pnand %p495, %p496
      %p498 = pneg %p497
      // Predicated region
      $region69: #{network_forward.1} parent=5 // pred_check
        _
      $region70: #{network_forward.1} parent=5 // pred_check_branch
        %500 = sbr.rel (%p497) target = $region72
      $region71: #{network_forward.1} parent=5 // pred_region
        %s501 = ssub.s32 %s28, 1
        // Predicated region
        $region73: #{network_forward.1} parent=71 // pred_check
          %p502 = pneg %p75
        $region74: #{network_forward.1} parent=71 // pred_check_branch
          %504 = sbr.rel (%p502) target = $region76
        $region75: #{network_forward.1} parent=71 // pred_region
          %506 = dma.done [#allocation4], 2560
        $region76: #{network_forward.1} parent=71 // pred_fallthru
          _
        // Predicated region
        $region77: #{network_forward.1} parent=71 // pred_check
          %p507 = pneg %p96
        $region78: #{network_forward.1} parent=71 // pred_check_branch
          %509 = sbr.rel (%p507) target = $region80
        $region79: #{network_forward.1} parent=71 // pred_region
          %511 = dma.done [#allocation7], 32
        $region80: #{network_forward.1} parent=71 // pred_fallthru
          _
        // Predicated region
        $region81: #{network_forward.1} parent=71 // pred_check
          %p512 = pneg %p117
        $region82: #{network_forward.1} parent=71 // pred_check_branch
          %514 = sbr.rel (%p512) target = $region84
        $region83: #{network_forward.1} parent=71 // pred_region
          %516 = dma.done [#allocation7], 10240
        $region84: #{network_forward.1} parent=71 // pred_fallthru
          _
        // Predicated region
        $region85: #{network_forward.1} parent=71 // pred_check
          %p517 = pneg %p138
        $region86: #{network_forward.1} parent=71 // pred_check_branch
          %519 = sbr.rel (%p517) target = $region88
        $region87: #{network_forward.1} parent=71 // pred_region
          %521 = dma.done [#allocation10], 32
        $region88: #{network_forward.1} parent=71 // pred_fallthru
          _
        // Predicated region
        $region89: #{network_forward.1} parent=71 // pred_check
          %p522 = pneg %p180
        $region90: #{network_forward.1} parent=71 // pred_check_branch
          %524 = sbr.rel (%p522) target = $region92
        $region91: #{network_forward.1} parent=71 // pred_region
          %526 = dma.done [#allocation10], 64
        $region92: #{network_forward.1} parent=71 // pred_fallthru
          _
        // Predicated region
        $region93: #{network_forward.1} parent=71 // pred_check
          %p527 = pneg %p222
        $region94: #{network_forward.1} parent=71 // pred_check_branch
          %529 = sbr.rel (%p527) target = $region96
        $region95: #{network_forward.1} parent=71 // pred_region
          %531 = dma.done [#allocation13], 16
        $region96: #{network_forward.1} parent=71 // pred_fallthru
          _
        // Predicated region
        $region97: #{network_forward.1} parent=71 // pred_check
          %p532 = pneg %p243
        $region98: #{network_forward.1} parent=71 // pred_check_branch
          %534 = sbr.rel (%p532) target = $region100
        $region99: #{network_forward.1} parent=71 // pred_region
          %536 = dma.done [#allocation13], 1024
        $region100: #{network_forward.1} parent=71 // pred_fallthru
          _
        // Predicated region
        $region101: #{network_forward.1} parent=71 // pred_check
          %p537 = pneg %p264
        $region102: #{network_forward.1} parent=71 // pred_check_branch
          %539 = sbr.rel (%p537) target = $region104
        $region103: #{network_forward.1} parent=71 // pred_region
          %541 = dma.done [#allocation16], 16
        $region104: #{network_forward.1} parent=71 // pred_fallthru
          _
        // Predicated region
        $region105: #{network_forward.1} parent=71 // pred_check
          %p542 = pneg %p285
        $region106: #{network_forward.1} parent=71 // pred_check_branch
          %544 = sbr.rel (%p542) target = $region108
        $region107: #{network_forward.1} parent=71 // pred_region
          %546 = dma.done [#allocation16], 1024
        $region108: #{network_forward.1} parent=71 // pred_fallthru
          _
        // Predicated region
        $region109: #{network_forward.1} parent=71 // pred_check
          %p547 = pneg %p306
        $region110: #{network_forward.1} parent=71 // pred_check_branch
          %549 = sbr.rel (%p547) target = $region112
        $region111: #{network_forward.1} parent=71 // pred_region
          %551 = dma.done [#allocation19], 16
        $region112: #{network_forward.1} parent=71 // pred_fallthru
          _
        %p552 = scmp.lt.s32.totalorder %s33, 1
        %s553 = scalar_select %p552, %s33, 1
        %s554 = smul.addr %s553, 4
        %s555 = smul.addr %s554, 8
        %s556 = scalar_lea.vmem %s0, %s555
        %p557 = pneg %p54
        %p558 = pneg %p51
        %p559 = pneg %p75
        %p560 = pneg %p72
        %p561 = pneg %p96
        %p562 = pneg %p93
        %p563 = pneg %p117
        %p564 = pneg %p114
        %p565 = pneg %p138
        %p566 = pneg %p135
        %p567 = pneg %p159
        %p568 = pneg %p156
        %p569 = pneg %p180
        %p570 = pneg %p177
        %p571 = pneg %p201
        %p572 = pneg %p198
        %p573 = pneg %p222
        %p574 = pneg %p219
        %p575 = pneg %p243
        %p576 = pneg %p240
        %p577 = pneg %p264
        %p578 = pneg %p261
        %p579 = pneg %p285
        %p580 = pneg %p282
        %p581 = pneg %p306
        %p582 = pneg %p303
        %p583 = pneg %p332
        %p584 = pneg %p329
        %s585 = sand.u32 %s319, 1
        %s586 = scalar_lea.sflag [#allocation5], %s585
        %s587 = sand.u32 %s319, 1
        %s588 = scalar_lea.vmem [#allocation20], %s587
        %p589 = scmp.lt.s32.totalorder %s33, 1
        %s590 = scalar_select %p589, %s33, 1
        %s591 = smul.addr %s590, 4
        %s592 = smul.addr %s591, 8
        %s593 = scalar_lea.vmem %s0, %s592
        %v595 = vld [vmem:[%s593] sm:$0xff]
        %v596 = vld [vmem:[%s593 + $0x8] sm:$0xff]
        %v597 = vld [vmem:[%s593 + $0x10] sm:$0xff]
        %v598 = vld [vmem:[%s593 + $0x18] sm:$0xf]
        %v599 = vpack.c.bf16 %v596, %v595
        %v600 = vpack.c.bf16 %v597, %v597
        %v601 = vld [vmem:[#allocation3] sm:$0xff]
        %v602 = vld [vmem:[#allocation3 + $0x8] sm:$0xff]
        %v603 = vld [vmem:[#allocation3 + $0x10] sm:$0xff]
        %v604 = vld [vmem:[#allocation3 + $0x18] sm:$0x33]
        %v605 = vpack.c.bf16 %v598, %v597
        %s606 = scalar_lea.vmem [#allocation3], 32
        %v607 = vld [vmem:[%s606] sm:$0xff]
        %v608 = vld [vmem:[%s606 + $0x8] sm:$0xff]
        %v609 = vld [vmem:[%s606 + $0x10] sm:$0xff]
        %v610 = vld [vmem:[%s606 + $0x18] sm:$0x33]
        %vm611 = vsmask.f32 7424
        %v613 = vshrl.u32 %v599, 16
        %v615 = vshll.u32 %v599, 16
        %v617 = vrot.slane %v615, 1
        %v618 = vor.u32 %v613, %v617
        %v620 = vshll.u32 %v605, 16
        %v622 = vrot.slane %v620, 1
        %v623 = vsel %vm611, %v618, %v622
        %v624 = vshrl.u32 %v605, 16
        %v626 = vor.u32 %v624, %v622
        %v631 = vunpack.c.l.b16 %v607
        %v632 = vunpack.c.h.b16 %v607
        %v633 = vunpack.c.l.b16 %v608
        %v634 = vunpack.c.h.b16 %v608
        %v635 = vunpack.c.l.b16 %v609
        %v636 = vunpack.c.h.b16 %v609
        %v637 = vunpack.c.l.b16 %v610
        %v638 = vunpack.c.h.b16 %v610
        %v639 = vpack.c.b16 %v633, %v631
        %v640 = vpack.c.b16 %v634, %v632
        %v641 = vpack.c.b16 %v637, %v635
        %v642 = vpack.c.b16 %v638, %v636
        %vm645 = vcmask 228352
        %v647 = vsel %vm645, %v623, 0
        %v650 = vsel %vm645, %v626, 0
        %vm652 = vcmask 1045504
        %v654 = vsel %vm652, %v641, 0
        %v657 = vsel %vm652, %v642, 0
        %659 = vmatpush.bf16.msra.mxu0 0
        %660 = vmatpush.bf16.msra.mxu0 0
        %661 = vmatpush.bf16.msra.mxu0 0
        %662 = vmatpush.bf16.msra.mxu0 0
        %663 = vmatpush.bf16.msra.mxu0 0
        %664 = vmatpush.bf16.msra.mxu0 0
        %665 = vmatpush.bf16.msra.mxu0 %v654
        %666 = vmatpush.bf16.msra.mxu0 %v639
        %667 = vmatmul.bf16.gmra.mxu0 %v647
        %v668 = vpop.f32.mrf.mxu0
        %v669 = vadd.f32 0.0, %v668
        %v670 = vpop.f32.mrf.mxu0
        %v671 = vadd.f32 0.0, %v670
        %672 = vmatmul.bf16.gmra.mxu0 %v650
        %v673 = vpop.f32.mrf.mxu0
        %v674 = vadd.f32 0.0, %v673
        %v675 = vpop.f32.mrf.mxu0
        %676 = vdwg.mxu0
        %677 = vmatpush.bf16.msra.mxu0 0
        %678 = vmatpush.bf16.msra.mxu0 0
        %679 = vmatpush.bf16.msra.mxu0 0
        %680 = vmatpush.bf16.msra.mxu0 0
        %681 = vmatpush.bf16.msra.mxu0 0
        %682 = vmatpush.bf16.msra.mxu0 0
        %683 = vmatpush.bf16.msra.mxu0 %v657
        %684 = vmatpush.bf16.msra.mxu0 %v640
        %685 = vmatmul.bf16.gmra.mxu0 %v647
        %v686 = vpop.f32.mrf.mxu0
        %v687 = vadd.f32 0.0, %v686
        %v688 = vpop.f32.mrf.mxu0
        %v689 = vadd.f32 0.0, %v688
        %690 = vmatmul.bf16.gmra.mxu0 %v650
        %v691 = vpop.f32.mrf.mxu0
        %v692 = vadd.f32 0.0, %v691
        %v693 = vpop.f32.mrf.mxu0
        %694 = vdwg.mxu0
        %v699 = vunpack.c.l.b16 %v601
        %v700 = vunpack.c.h.b16 %v601
        %v701 = vunpack.c.l.b16 %v602
        %v702 = vunpack.c.h.b16 %v602
        %v703 = vunpack.c.l.b16 %v603
        %v704 = vunpack.c.h.b16 %v603
        %v705 = vunpack.c.l.b16 %v604
        %v706 = vunpack.c.h.b16 %v604
        %v707 = vpack.c.b16 %v701, %v699
        %v708 = vpack.c.b16 %v702, %v700
        %v709 = vpack.c.b16 %v705, %v703
        %v710 = vpack.c.b16 %v706, %v704
        %v713 = vsel %vm645, %v599, 0
        %v716 = vsel %vm645, %v600, 0
        %v719 = vsel %vm652, %v709, 0
        %v722 = vsel %vm652, %v710, 0
        %724 = vmatpush.bf16.msra.mxu0 0
        %725 = vmatpush.bf16.msra.mxu0 0
        %726 = vmatpush.bf16.msra.mxu0 0
        %727 = vmatpush.bf16.msra.mxu0 0
        %728 = vmatpush.bf16.msra.mxu0 0
        %729 = vmatpush.bf16.msra.mxu0 0
        %730 = vmatpush.bf16.msra.mxu0 %v719
        %731 = vmatpush.bf16.msra.mxu0 %v707
        %732 = vmatmul.bf16.gmra.mxu0 %v713
        %v733 = vpop.f32.mrf.mxu0
        %v734 = vadd.f32 %v669, %v733
        %v735 = vpop.f32.mrf.mxu0
        %v736 = vadd.f32 %v671, %v735
        %737 = vmatmul.bf16.gmra.mxu0 %v716
        %v738 = vpop.f32.mrf.mxu0
        %v739 = vadd.f32 %v674, %v738
        %v740 = vpop.f32.mrf.mxu0
        %741 = vdwg.mxu0
        %742 = vmatpush.bf16.msra.mxu0 0
        %743 = vmatpush.bf16.msra.mxu0 0
        %744 = vmatpush.bf16.msra.mxu0 0
        %745 = vmatpush.bf16.msra.mxu0 0
        %746 = vmatpush.bf16.msra.mxu0 0
        %747 = vmatpush.bf16.msra.mxu0 0
        %748 = vmatpush.bf16.msra.mxu0 %v722
        %749 = vmatpush.bf16.msra.mxu0 %v708
        %750 = vmatmul.bf16.gmra.mxu0 %v713
        %v751 = vpop.f32.mrf.mxu0
        %v752 = vadd.f32 %v687, %v751
        %v753 = vpop.f32.mrf.mxu0
        %v754 = vadd.f32 %v689, %v753
        %755 = vmatmul.bf16.gmra.mxu0 %v716
        %v756 = vpop.f32.mrf.mxu0
        %v757 = vadd.f32 %v692, %v756
        %v758 = vpop.f32.mrf.mxu0
        %759 = vdwg.mxu0
        %s760 = scalar_lea.vmem [#allocation3], 64
        %v761 = vld [vmem:[%s760] sm:$0xff]
        %v762 = vld [vmem:[%s760 + $0x8] sm:$0xff]
        %v763 = vld [vmem:[%s760 + $0x10] sm:$0xff]
        %v764 = vld [vmem:[%s760 + $0x18] sm:$0x33]
        %vm767 = vcmask 1046528
        %v768 = vrot.slane %v599, 1
        %v769 = vrot.slane %v605, 1
        %v770 = vsel %vm767, %v768, %v769
        %v775 = vunpack.c.l.b16 %v761
        %v776 = vunpack.c.h.b16 %v761
        %v777 = vunpack.c.l.b16 %v762
        %v778 = vunpack.c.h.b16 %v762
        %v779 = vunpack.c.l.b16 %v763
        %v780 = vunpack.c.h.b16 %v763
        %v781 = vunpack.c.l.b16 %v764
        %v782 = vunpack.c.h.b16 %v764
        %v783 = vpack.c.b16 %v777, %v775
        %v784 = vpack.c.b16 %v778, %v776
        %v785 = vpack.c.b16 %v781, %v779
        %v786 = vpack.c.b16 %v782, %v780
        %v790 = vsel %vm645, %v770, 0
        %v793 = vsel %vm645, %v769, 0
        %v796 = vsel %vm652, %v785, 0
        %v799 = vsel %vm652, %v786, 0
        %801 = vmatpush.bf16.msra.mxu0 0
        %802 = vmatpush.bf16.msra.mxu0 0
        %803 = vmatpush.bf16.msra.mxu0 0
        %804 = vmatpush.bf16.msra.mxu0 0
        %805 = vmatpush.bf16.msra.mxu0 0
        %806 = vmatpush.bf16.msra.mxu0 0
        %807 = vmatpush.bf16.msra.mxu0 %v796
        %808 = vmatpush.bf16.msra.mxu0 %v783
        %809 = vmatmul.bf16.gmra.mxu0 %v790
        %v810 = vpop.f32.mrf.mxu0
        %v811 = vadd.f32 0.0, %v810
        %v812 = vpop.f32.mrf.mxu0
        %v813 = vadd.f32 0.0, %v812
        %814 = vmatmul.bf16.gmra.mxu0 %v793
        %v815 = vpop.f32.mrf.mxu0
        %v816 = vadd.f32 0.0, %v815
        %v817 = vpop.f32.mrf.mxu0
        %818 = vdwg.mxu0
        %819 = vmatpush.bf16.msra.mxu0 0
        %820 = vmatpush.bf16.msra.mxu0 0
        %821 = vmatpush.bf16.msra.mxu0 0
        %822 = vmatpush.bf16.msra.mxu0 0
        %823 = vmatpush.bf16.msra.mxu0 0
        %824 = vmatpush.bf16.msra.mxu0 0
        %825 = vmatpush.bf16.msra.mxu0 %v799
        %826 = vmatpush.bf16.msra.mxu0 %v784
        %827 = vmatmul.bf16.gmra.mxu0 %v790
        %v828 = vpop.f32.mrf.mxu0
        %v829 = vadd.f32 0.0, %v828
        %v830 = vpop.f32.mrf.mxu0
        %v831 = vadd.f32 0.0, %v830
        %832 = vmatmul.bf16.gmra.mxu0 %v793
        %v833 = vpop.f32.mrf.mxu0
        %v834 = vadd.f32 0.0, %v833
        %v835 = vpop.f32.mrf.mxu0
        %836 = vdwg.mxu0
        %v837 = vadd.f32 %v734, %v811
        %v838 = vadd.f32 %v752, %v829
        %v839 = vadd.f32 %v736, %v813
        %v840 = vadd.f32 %v754, %v831
        %v841 = vadd.f32 %v739, %v816
        %v842 = vadd.f32 %v757, %v834
        %s843 = scalar_lea.vmem [#allocation3], 96
        %v844 = vld [vmem:[%s843] sm:$0xff]
        %v845 = vld [vmem:[%s843 + $0x8] sm:$0xff]
        %v846 = vld [vmem:[%s843 + $0x10] sm:$0xff]
        %v847 = vld [vmem:[%s843 + $0x18] sm:$0x33]
        %vm848 = vsmask.f32 6400
        %v849 = vrot.slane %v613, 1
        %v850 = vrot.slane %v615, 2
        %v851 = vor.u32 %v849, %v850
        %v852 = vrot.slane %v624, 1
        %v853 = vrot.slane %v620, 2
        %v854 = vor.u32 %v852, %v853
        %v855 = vsel %vm848, %v851, %v854
        %v860 = vunpack.c.l.b16 %v844
        %v861 = vunpack.c.h.b16 %v844
        %v862 = vunpack.c.l.b16 %v845
        %v863 = vunpack.c.h.b16 %v845
        %v864 = vunpack.c.l.b16 %v846
        %v865 = vunpack.c.h.b16 %v846
        %v866 = vunpack.c.l.b16 %v847
        %v867 = vunpack.c.h.b16 %v847
        %v868 = vpack.c.b16 %v862, %v860
        %v869 = vpack.c.b16 %v863, %v861
        %v870 = vpack.c.b16 %v866, %v864
        %v871 = vpack.c.b16 %v867, %v865
        %v875 = vsel %vm645, %v855, 0
        %v878 = vsel %vm645, %v854, 0
        %v881 = vsel %vm652, %v870, 0
        %v884 = vsel %vm652, %v871, 0
        %886 = vmatpush.bf16.msra.mxu0 0
        %887 = vmatpush.bf16.msra.mxu0 0
        %888 = vmatpush.bf16.msra.mxu0 0
        %889 = vmatpush.bf16.msra.mxu0 0
        %890 = vmatpush.bf16.msra.mxu0 0
        %891 = vmatpush.bf16.msra.mxu0 0
        %892 = vmatpush.bf16.msra.mxu0 %v881
        %893 = vmatpush.bf16.msra.mxu0 %v868
        %894 = vmatmul.bf16.gmra.mxu0 %v875
        %v895 = vpop.f32.mrf.mxu0
        %v896 = vadd.f32 0.0, %v895
        %v897 = vpop.f32.mrf.mxu0
        %v898 = vadd.f32 0.0, %v897
        %899 = vmatmul.bf16.gmra.mxu0 %v878
        %v900 = vpop.f32.mrf.mxu0
        %v901 = vadd.f32 0.0, %v900
        %v902 = vpop.f32.mrf.mxu0
        %903 = vdwg.mxu0
        %904 = vmatpush.bf16.msra.mxu0 0
        %905 = vmatpush.bf16.msra.mxu0 0
        %906 = vmatpush.bf16.msra.mxu0 0
        %907 = vmatpush.bf16.msra.mxu0 0
        %908 = vmatpush.bf16.msra.mxu0 0
        %909 = vmatpush.bf16.msra.mxu0 0
        %910 = vmatpush.bf16.msra.mxu0 %v884
        %911 = vmatpush.bf16.msra.mxu0 %v869
        %912 = vmatmul.bf16.gmra.mxu0 %v875
        %v913 = vpop.f32.mrf.mxu0
        %v914 = vadd.f32 0.0, %v913
        %v915 = vpop.f32.mrf.mxu0
        %v916 = vadd.f32 0.0, %v915
        %917 = vmatmul.bf16.gmra.mxu0 %v878
        %v918 = vpop.f32.mrf.mxu0
        %v919 = vadd.f32 0.0, %v918
        %v920 = vpop.f32.mrf.mxu0
        %921 = vdwg.mxu0
        %v922 = vadd.f32 %v837, %v896
        %v923 = vadd.f32 %v838, %v914
        %v924 = vadd.f32 %v839, %v898
        %v925 = vadd.f32 %v840, %v916
        %v926 = vadd.f32 %v841, %v901
        %v927 = vadd.f32 %v842, %v919
        %s928 = scalar_lea.vmem [#allocation3], 128
        %v929 = vld [vmem:[%s928] sm:$0xff]
        %v930 = vld [vmem:[%s928 + $0x8] sm:$0xff]
        %v931 = vld [vmem:[%s928 + $0x10] sm:$0xff]
        %v932 = vld [vmem:[%s928 + $0x18] sm:$0x33]
        %vm933 = vcmask 1045504
        %v934 = vrot.slane %v599, 2
        %v935 = vrot.slane %v605, 2
        %v936 = vsel %vm933, %v934, %v935
        %v941 = vunpack.c.l.b16 %v929
        %v942 = vunpack.c.h.b16 %v929
        %v943 = vunpack.c.l.b16 %v930
        %v944 = vunpack.c.h.b16 %v930
        %v945 = vunpack.c.l.b16 %v931
        %v946 = vunpack.c.h.b16 %v931
        %v947 = vunpack.c.l.b16 %v932
        %v948 = vunpack.c.h.b16 %v932
        %v949 = vpack.c.b16 %v943, %v941
        %v950 = vpack.c.b16 %v944, %v942
        %v951 = vpack.c.b16 %v947, %v945
        %v952 = vpack.c.b16 %v948, %v946
        %v956 = vsel %vm645, %v936, 0
        %v959 = vsel %vm645, %v935, 0
        %v962 = vsel %vm652, %v951, 0
        %v965 = vsel %vm652, %v952, 0
        %967 = vmatpush.bf16.msra.mxu0 0
        %968 = vmatpush.bf16.msra.mxu0 0
        %969 = vmatpush.bf16.msra.mxu0 0
        %970 = vmatpush.bf16.msra.mxu0 0
        %971 = vmatpush.bf16.msra.mxu0 0
        %972 = vmatpush.bf16.msra.mxu0 0
        %973 = vmatpush.bf16.msra.mxu0 %v962
        %974 = vmatpush.bf16.msra.mxu0 %v949
        %975 = vmatmul.bf16.gmra.mxu0 %v956
        %v976 = vpop.f32.mrf.mxu0
        %v977 = vadd.f32 0.0, %v976
        %v978 = vpop.f32.mrf.mxu0
        %v979 = vadd.f32 0.0, %v978
        %980 = vmatmul.bf16.gmra.mxu0 %v959
        %v981 = vpop.f32.mrf.mxu0
        %v982 = vadd.f32 0.0, %v981
        %v983 = vpop.f32.mrf.mxu0
        %984 = vdwg.mxu0
        %985 = vmatpush.bf16.msra.mxu0 0
        %986 = vmatpush.bf16.msra.mxu0 0
        %987 = vmatpush.bf16.msra.mxu0 0
        %988 = vmatpush.bf16.msra.mxu0 0
        %989 = vmatpush.bf16.msra.mxu0 0
        %990 = vmatpush.bf16.msra.mxu0 0
        %991 = vmatpush.bf16.msra.mxu0 %v965
        %992 = vmatpush.bf16.msra.mxu0 %v950
        %993 = vmatmul.bf16.gmra.mxu0 %v956
        %v994 = vpop.f32.mrf.mxu0
        %v995 = vadd.f32 0.0, %v994
        %v996 = vpop.f32.mrf.mxu0
        %v997 = vadd.f32 0.0, %v996
        %998 = vmatmul.bf16.gmra.mxu0 %v959
        %v999 = vpop.f32.mrf.mxu0
        %v1000 = vadd.f32 0.0, %v999
        %v1001 = vpop.f32.mrf.mxu0
        %1002 = vdwg.mxu0
        %v1003 = vadd.f32 %v922, %v977
        %v1004 = vadd.f32 %v923, %v995
        %v1005 = vadd.f32 %v924, %v979
        %v1006 = vadd.f32 %v925, %v997
        %v1007 = vadd.f32 %v926, %v982
        %v1008 = vadd.f32 %v927, %v1000
        %v1009 = vld [vmem:[#allocation6] sm:$0x3]
        %v1011 = vperm.slane %v1009, 0
        %v1012 = vperm.slane %v1009, 1
        %v1015 = vadd.f32 %v1003, %v1011
        %v1016 = vadd.f32 %v1004, %v1012
        %v1017 = vadd.f32 %v1005, %v1011
        %v1018 = vadd.f32 %v1006, %v1012
        %v1019 = vadd.f32 %v1007, %v1011
        %v1020 = vadd.f32 %v1008, %v1012
        %v1021 = vmax.f32 %v1015, 0.0
        %v1022 = vmax.f32 %v1016, 0.0
        %v1023 = vmax.f32 %v1017, 0.0
        %v1024 = vmax.f32 %v1018, 0.0
        %v1025 = vmax.f32 %v1019, 0.0
        %v1026 = vmax.f32 %v1020, 0.0
        %v1027 = vmax.f32 %v1021, %v1022
        %v1028 = vmax.f32 %v1023, %v1024
        %v1029 = vmax.f32 %v1025, %v1026
        %v1030 = vpack.c.bf16 %v1028, %v1027
        %v1031 = vpack.c.bf16 %v1029, %v1029
        %v1032 = vld [vmem:[%s5] sm:$0xf]
        %v1033 = vld [vmem:[%s5 + $0x4] sm:$0x3]
        %v1036 = vunpack.c.l.b16 %v1032
        %v1037 = vunpack.c.l.b16 %v1033
        %v1038 = vpack.c.b16 %v1037, %v1036
        %vm1039 = vcmask 195584
        %v1041 = vsel %vm1039, %v1038, 0
        %vm1043 = vcmask 1043456
        %v1045 = vsel %vm1043, %v1031, 0
        %1047 = vmatpush.bf16.msra.mxu0 0
        %1048 = vmatpush.bf16.msra.mxu0 0
        %1049 = vmatpush.bf16.msra.mxu0 0
        %1050 = vmatpush.bf16.msra.mxu0 0
        %1051 = vmatpush.bf16.msra.mxu0 0
        %1052 = vmatpush.bf16.msra.mxu0 0
        %1053 = vmatpush.bf16.msra.mxu0 %v1045
        %1054 = vmatpush.bf16.msra.mxu0 %v1030
        %1055 = vmatmul.bf16.gmra.mxu0 %v1041
        %v1056 = vpop.f32.mrf.mxu0
        %v1057 = vadd.f32 0.0, %v1056
        %v1058 = vpop.f32.mrf.mxu0
        %v1059 = vadd.f32 0.0, %v1058
        %1060 = vdwg.mxu0
        %s1061 = scalar_lea.vmem %s5, 8
        %v1062 = vld [vmem:[%s1061] sm:$0xf]
        %v1063 = vld [vmem:[%s1061 + $0x4] sm:$0x3]
        %v1066 = vunpack.c.l.b16 %v1062
        %v1067 = vunpack.c.l.b16 %v1063
        %v1068 = vpack.c.b16 %v1067, %v1066
        %v1070 = vsel %vm1039, %v1068, 0
        %1072 = vmatpush.bf16.msra.mxu0 0
        %1073 = vmatpush.bf16.msra.mxu0 0
        %1074 = vmatpush.bf16.msra.mxu0 0
        %1075 = vmatpush.bf16.msra.mxu0 0
        %1076 = vmatpush.bf16.msra.mxu0 0
        %1077 = vmatpush.bf16.msra.mxu0 0
        %1078 = vmatpush.bf16.msra.mxu0 %v1045
        %1079 = vmatpush.bf16.msra.mxu0 %v1030
        %1080 = vmatmul.bf16.gmra.mxu0 %v1070
        %v1081 = vpop.f32.mrf.mxu0
        %v1082 = vadd.f32 0.0, %v1081
        %v1083 = vpop.f32.mrf.mxu0
        %v1084 = vadd.f32 0.0, %v1083
        %1085 = vdwg.mxu0
        %v1086 = vmax.f32 %v1057, %v1082
        %v1087 = vmax.f32 %v1059, %v1084
        %v1088 = vpack.c.bf16 %v1086, %v1086
        %v1089 = vld [vmem:[#allocation8] sm:$0xff]
        %v1090 = vld [vmem:[#allocation8 + $0x8] sm:$0xff]
        %v1091 = vld [vmem:[#allocation8 + $0x10] sm:$0xff]
        %v1092 = vld [vmem:[#allocation8 + $0x18] sm:$0xff]
        %v1093 = vld [vmem:[#allocation8 + $0x20] sm:$0xff]
        %v1094 = vld [vmem:[#allocation8 + $0x28] sm:$0xff]
        %v1095 = vld [vmem:[#allocation8 + $0x30] sm:$0xff]
        %v1096 = vld [vmem:[#allocation8 + $0x38] sm:$0xff]
        %v1097 = vld [vmem:[#allocation8 + $0x40] sm:$0xff]
        %v1098 = vld [vmem:[#allocation8 + $0x48] sm:$0xff]
        %v1099 = vld [vmem:[#allocation8 + $0x50] sm:$0xff]
        %v1100 = vld [vmem:[#allocation8 + $0x58] sm:$0xff]
        %v1101 = vld [vmem:[#allocation8 + $0x60] sm:$0xff]
        %v1102 = vld [vmem:[#allocation8 + $0x68] sm:$0xff]
        %v1103 = vld [vmem:[#allocation8 + $0x70] sm:$0xff]
        %v1104 = vld [vmem:[#allocation8 + $0x78] sm:$0xff]
        %v1105 = vpack.c.bf16 %v1087, %v1086
        %s1106 = scalar_lea.vmem [#allocation8], 128
        %v1107 = vld [vmem:[%s1106] sm:$0xff]
        %v1108 = vld [vmem:[%s1106 + $0x8] sm:$0xff]
        %v1109 = vld [vmem:[%s1106 + $0x10] sm:$0xff]
        %v1110 = vld [vmem:[%s1106 + $0x18] sm:$0xff]
        %v1111 = vld [vmem:[%s1106 + $0x20] sm:$0xff]
        %v1112 = vld [vmem:[%s1106 + $0x28] sm:$0xff]
        %v1113 = vld [vmem:[%s1106 + $0x30] sm:$0xff]
        %v1114 = vld [vmem:[%s1106 + $0x38] sm:$0xff]
        %v1115 = vld [vmem:[%s1106 + $0x40] sm:$0xff]
        %v1116 = vld [vmem:[%s1106 + $0x48] sm:$0xff]
        %v1117 = vld [vmem:[%s1106 + $0x50] sm:$0xff]
        %v1118 = vld [vmem:[%s1106 + $0x58] sm:$0xff]
        %v1119 = vld [vmem:[%s1106 + $0x60] sm:$0xff]
        %v1120 = vld [vmem:[%s1106 + $0x68] sm:$0xff]
        %v1121 = vld [vmem:[%s1106 + $0x70] sm:$0xff]
        %v1122 = vld [vmem:[%s1106 + $0x78] sm:$0xff]
        %v1124 = vshrl.u32 %v1105, 16
        %v1126 = vshll.u32 %v1105, 16
        %v1128 = vrot.slane %v1126, 1
        %v1129 = vor.u32 %v1124, %v1128
        %v1147 = vunpack.c.l.b16 %v1107
        %v1148 = vunpack.c.h.b16 %v1107
        %v1149 = vunpack.c.l.b16 %v1108
        %v1150 = vunpack.c.h.b16 %v1108
        %v1151 = vunpack.c.l.b16 %v1109
        %v1152 = vunpack.c.h.b16 %v1109
        %v1153 = vunpack.c.l.b16 %v1110
        %v1154 = vunpack.c.h.b16 %v1110
        %v1155 = vunpack.c.l.b16 %v1111
        %v1156 = vunpack.c.h.b16 %v1111
        %v1157 = vunpack.c.l.b16 %v1112
        %v1158 = vunpack.c.h.b16 %v1112
        %v1159 = vunpack.c.l.b16 %v1113
        %v1160 = vunpack.c.h.b16 %v1113
        %v1161 = vunpack.c.l.b16 %v1114
        %v1162 = vunpack.c.h.b16 %v1114
        %v1163 = vunpack.c.l.b16 %v1115
        %v1164 = vunpack.c.h.b16 %v1115
        %v1165 = vunpack.c.l.b16 %v1116
        %v1166 = vunpack.c.h.b16 %v1116
        %v1167 = vunpack.c.l.b16 %v1117
        %v1168 = vunpack.c.h.b16 %v1117
        %v1169 = vunpack.c.l.b16 %v1118
        %v1170 = vunpack.c.h.b16 %v1118
        %v1171 = vunpack.c.l.b16 %v1119
        %v1172 = vunpack.c.h.b16 %v1119
        %v1173 = vunpack.c.l.b16 %v1120
        %v1174 = vunpack.c.h.b16 %v1120
        %v1175 = vunpack.c.l.b16 %v1121
        %v1176 = vunpack.c.h.b16 %v1121
        %v1177 = vunpack.c.l.b16 %v1122
        %v1178 = vunpack.c.h.b16 %v1122
        %v1179 = vpack.c.b16 %v1149, %v1147
        %v1180 = vpack.c.b16 %v1150, %v1148
        %v1181 = vpack.c.b16 %v1153, %v1151
        %v1182 = vpack.c.b16 %v1154, %v1152
        %v1183 = vpack.c.b16 %v1157, %v1155
        %v1184 = vpack.c.b16 %v1158, %v1156
        %v1185 = vpack.c.b16 %v1161, %v1159
        %v1186 = vpack.c.b16 %v1162, %v1160
        %v1187 = vpack.c.b16 %v1165, %v1163
        %v1188 = vpack.c.b16 %v1166, %v1164
        %v1189 = vpack.c.b16 %v1169, %v1167
        %v1190 = vpack.c.b16 %v1170, %v1168
        %v1191 = vpack.c.b16 %v1173, %v1171
        %v1192 = vpack.c.b16 %v1174, %v1172
        %v1193 = vpack.c.b16 %v1177, %v1175
        %v1194 = vpack.c.b16 %v1178, %v1176
        %1211 = vmatpush.bf16.msra.mxu0 %v1193
        %1212 = vmatpush.bf16.msra.mxu0 %v1191
        %1213 = vmatpush.bf16.msra.mxu0 %v1189
        %1214 = vmatpush.bf16.msra.mxu0 %v1187
        %1215 = vmatpush.bf16.msra.mxu0 %v1185
        %1216 = vmatpush.bf16.msra.mxu0 %v1183
        %1217 = vmatpush.bf16.msra.mxu0 %v1181
        %1218 = vmatpush.bf16.msra.mxu0 %v1179
        %1219 = vmatmul.bf16.gmra.mxu0 %v1129
        %v1220 = vpop.f32.mrf.mxu0
        %v1221 = vadd.f32 0.0, %v1220
        %v1222 = vpop.f32.mrf.mxu0
        %1223 = vdwg.mxu0
        %1224 = vmatpush.bf16.msra.mxu0 %v1194
        %1225 = vmatpush.bf16.msra.mxu0 %v1192
        %1226 = vmatpush.bf16.msra.mxu0 %v1190
        %1227 = vmatpush.bf16.msra.mxu0 %v1188
        %1228 = vmatpush.bf16.msra.mxu0 %v1186
        %1229 = vmatpush.bf16.msra.mxu0 %v1184
        %1230 = vmatpush.bf16.msra.mxu0 %v1182
        %1231 = vmatpush.bf16.msra.mxu0 %v1180
        %1232 = vmatmul.bf16.gmra.mxu0 %v1129
        %v1233 = vpop.f32.mrf.mxu0
        %v1234 = vadd.f32 0.0, %v1233
        %v1235 = vpop.f32.mrf.mxu0
        %1236 = vdwg.mxu0
        %v1253 = vunpack.c.l.b16 %v1089
        %v1254 = vunpack.c.h.b16 %v1089
        %v1255 = vunpack.c.l.b16 %v1090
        %v1256 = vunpack.c.h.b16 %v1090
        %v1257 = vunpack.c.l.b16 %v1091
        %v1258 = vunpack.c.h.b16 %v1091
        %v1259 = vunpack.c.l.b16 %v1092
        %v1260 = vunpack.c.h.b16 %v1092
        %v1261 = vunpack.c.l.b16 %v1093
        %v1262 = vunpack.c.h.b16 %v1093
        %v1263 = vunpack.c.l.b16 %v1094
        %v1264 = vunpack.c.h.b16 %v1094
        %v1265 = vunpack.c.l.b16 %v1095
        %v1266 = vunpack.c.h.b16 %v1095
        %v1267 = vunpack.c.l.b16 %v1096
        %v1268 = vunpack.c.h.b16 %v1096
        %v1269 = vunpack.c.l.b16 %v1097
        %v1270 = vunpack.c.h.b16 %v1097
        %v1271 = vunpack.c.l.b16 %v1098
        %v1272 = vunpack.c.h.b16 %v1098
        %v1273 = vunpack.c.l.b16 %v1099
        %v1274 = vunpack.c.h.b16 %v1099
        %v1275 = vunpack.c.l.b16 %v1100
        %v1276 = vunpack.c.h.b16 %v1100
        %v1277 = vunpack.c.l.b16 %v1101
        %v1278 = vunpack.c.h.b16 %v1101
        %v1279 = vunpack.c.l.b16 %v1102
        %v1280 = vunpack.c.h.b16 %v1102
        %v1281 = vunpack.c.l.b16 %v1103
        %v1282 = vunpack.c.h.b16 %v1103
        %v1283 = vunpack.c.l.b16 %v1104
        %v1284 = vunpack.c.h.b16 %v1104
        %v1285 = vpack.c.b16 %v1255, %v1253
        %v1286 = vpack.c.b16 %v1256, %v1254
        %v1287 = vpack.c.b16 %v1259, %v1257
        %v1288 = vpack.c.b16 %v1260, %v1258
        %v1289 = vpack.c.b16 %v1263, %v1261
        %v1290 = vpack.c.b16 %v1264, %v1262
        %v1291 = vpack.c.b16 %v1267, %v1265
        %v1292 = vpack.c.b16 %v1268, %v1266
        %v1293 = vpack.c.b16 %v1271, %v1269
        %v1294 = vpack.c.b16 %v1272, %v1270
        %v1295 = vpack.c.b16 %v1275, %v1273
        %v1296 = vpack.c.b16 %v1276, %v1274
        %v1297 = vpack.c.b16 %v1279, %v1277
        %v1298 = vpack.c.b16 %v1280, %v1278
        %v1299 = vpack.c.b16 %v1283, %v1281
        %v1300 = vpack.c.b16 %v1284, %v1282
        %1317 = vmatpush.bf16.msra.mxu0 %v1299
        %1318 = vmatpush.bf16.msra.mxu0 %v1297
        %1319 = vmatpush.bf16.msra.mxu0 %v1295
        %1320 = vmatpush.bf16.msra.mxu0 %v1293
        %1321 = vmatpush.bf16.msra.mxu0 %v1291
        %1322 = vmatpush.bf16.msra.mxu0 %v1289
        %1323 = vmatpush.bf16.msra.mxu0 %v1287
        %1324 = vmatpush.bf16.msra.mxu0 %v1285
        %1325 = vmatmul.bf16.gmra.mxu0 %v1088
        %v1326 = vpop.f32.mrf.mxu0
        %v1327 = vadd.f32 %v1221, %v1326
        %v1328 = vpop.f32.mrf.mxu0
        %1329 = vdwg.mxu0
        %1330 = vmatpush.bf16.msra.mxu0 %v1300
        %1331 = vmatpush.bf16.msra.mxu0 %v1298
        %1332 = vmatpush.bf16.msra.mxu0 %v1296
        %1333 = vmatpush.bf16.msra.mxu0 %v1294
        %1334 = vmatpush.bf16.msra.mxu0 %v1292
        %1335 = vmatpush.bf16.msra.mxu0 %v1290
        %1336 = vmatpush.bf16.msra.mxu0 %v1288
        %1337 = vmatpush.bf16.msra.mxu0 %v1286
        %1338 = vmatmul.bf16.gmra.mxu0 %v1088
        %v1339 = vpop.f32.mrf.mxu0
        %v1340 = vadd.f32 %v1234, %v1339
        %v1341 = vpop.f32.mrf.mxu0
        %1342 = vdwg.mxu0
        %s1343 = scalar_lea.vmem [#allocation8], 256
        %v1344 = vld [vmem:[%s1343] sm:$0xff]
        %v1345 = vld [vmem:[%s1343 + $0x8] sm:$0xff]
        %v1346 = vld [vmem:[%s1343 + $0x10] sm:$0xff]
        %v1347 = vld [vmem:[%s1343 + $0x18] sm:$0xff]
        %v1348 = vld [vmem:[%s1343 + $0x20] sm:$0xff]
        %v1349 = vld [vmem:[%s1343 + $0x28] sm:$0xff]
        %v1350 = vld [vmem:[%s1343 + $0x30] sm:$0xff]
        %v1351 = vld [vmem:[%s1343 + $0x38] sm:$0xff]
        %v1352 = vld [vmem:[%s1343 + $0x40] sm:$0xff]
        %v1353 = vld [vmem:[%s1343 + $0x48] sm:$0xff]
        %v1354 = vld [vmem:[%s1343 + $0x50] sm:$0xff]
        %v1355 = vld [vmem:[%s1343 + $0x58] sm:$0xff]
        %v1356 = vld [vmem:[%s1343 + $0x60] sm:$0xff]
        %v1357 = vld [vmem:[%s1343 + $0x68] sm:$0xff]
        %v1358 = vld [vmem:[%s1343 + $0x70] sm:$0xff]
        %v1359 = vld [vmem:[%s1343 + $0x78] sm:$0xff]
        %v1361 = vrot.slane %v1105, 1
        %v1379 = vunpack.c.l.b16 %v1344
        %v1380 = vunpack.c.h.b16 %v1344
        %v1381 = vunpack.c.l.b16 %v1345
        %v1382 = vunpack.c.h.b16 %v1345
        %v1383 = vunpack.c.l.b16 %v1346
        %v1384 = vunpack.c.h.b16 %v1346
        %v1385 = vunpack.c.l.b16 %v1347
        %v1386 = vunpack.c.h.b16 %v1347
        %v1387 = vunpack.c.l.b16 %v1348
        %v1388 = vunpack.c.h.b16 %v1348
        %v1389 = vunpack.c.l.b16 %v1349
        %v1390 = vunpack.c.h.b16 %v1349
        %v1391 = vunpack.c.l.b16 %v1350
        %v1392 = vunpack.c.h.b16 %v1350
        %v1393 = vunpack.c.l.b16 %v1351
        %v1394 = vunpack.c.h.b16 %v1351
        %v1395 = vunpack.c.l.b16 %v1352
        %v1396 = vunpack.c.h.b16 %v1352
        %v1397 = vunpack.c.l.b16 %v1353
        %v1398 = vunpack.c.h.b16 %v1353
        %v1399 = vunpack.c.l.b16 %v1354
        %v1400 = vunpack.c.h.b16 %v1354
        %v1401 = vunpack.c.l.b16 %v1355
        %v1402 = vunpack.c.h.b16 %v1355
        %v1403 = vunpack.c.l.b16 %v1356
        %v1404 = vunpack.c.h.b16 %v1356
        %v1405 = vunpack.c.l.b16 %v1357
        %v1406 = vunpack.c.h.b16 %v1357
        %v1407 = vunpack.c.l.b16 %v1358
        %v1408 = vunpack.c.h.b16 %v1358
        %v1409 = vunpack.c.l.b16 %v1359
        %v1410 = vunpack.c.h.b16 %v1359
        %v1411 = vpack.c.b16 %v1381, %v1379
        %v1412 = vpack.c.b16 %v1382, %v1380
        %v1413 = vpack.c.b16 %v1385, %v1383
        %v1414 = vpack.c.b16 %v1386, %v1384
        %v1415 = vpack.c.b16 %v1389, %v1387
        %v1416 = vpack.c.b16 %v1390, %v1388
        %v1417 = vpack.c.b16 %v1393, %v1391
        %v1418 = vpack.c.b16 %v1394, %v1392
        %v1419 = vpack.c.b16 %v1397, %v1395
        %v1420 = vpack.c.b16 %v1398, %v1396
        %v1421 = vpack.c.b16 %v1401, %v1399
        %v1422 = vpack.c.b16 %v1402, %v1400
        %v1423 = vpack.c.b16 %v1405, %v1403
        %v1424 = vpack.c.b16 %v1406, %v1404
        %v1425 = vpack.c.b16 %v1409, %v1407
        %v1426 = vpack.c.b16 %v1410, %v1408
        %1443 = vmatpush.bf16.msra.mxu0 %v1425
        %1444 = vmatpush.bf16.msra.mxu0 %v1423
        %1445 = vmatpush.bf16.msra.mxu0 %v1421
        %1446 = vmatpush.bf16.msra.mxu0 %v1419
        %1447 = vmatpush.bf16.msra.mxu0 %v1417
        %1448 = vmatpush.bf16.msra.mxu0 %v1415
        %1449 = vmatpush.bf16.msra.mxu0 %v1413
        %1450 = vmatpush.bf16.msra.mxu0 %v1411
        %1451 = vmatmul.bf16.gmra.mxu0 %v1361
        %v1452 = vpop.f32.mrf.mxu0
        %v1453 = vadd.f32 0.0, %v1452
        %v1454 = vpop.f32.mrf.mxu0
        %1455 = vdwg.mxu0
        %1456 = vmatpush.bf16.msra.mxu0 %v1426
        %1457 = vmatpush.bf16.msra.mxu0 %v1424
        %1458 = vmatpush.bf16.msra.mxu0 %v1422
        %1459 = vmatpush.bf16.msra.mxu0 %v1420
        %1460 = vmatpush.bf16.msra.mxu0 %v1418
        %1461 = vmatpush.bf16.msra.mxu0 %v1416
        %1462 = vmatpush.bf16.msra.mxu0 %v1414
        %1463 = vmatpush.bf16.msra.mxu0 %v1412
        %1464 = vmatmul.bf16.gmra.mxu0 %v1361
        %v1465 = vpop.f32.mrf.mxu0
        %v1466 = vadd.f32 0.0, %v1465
        %v1467 = vpop.f32.mrf.mxu0
        %1468 = vdwg.mxu0
        %v1469 = vadd.f32 %v1327, %v1453
        %v1470 = vadd.f32 %v1340, %v1466
        %s1471 = scalar_lea.vmem [#allocation8], 384
        %v1472 = vld [vmem:[%s1471] sm:$0xff]
        %v1473 = vld [vmem:[%s1471 + $0x8] sm:$0xff]
        %v1474 = vld [vmem:[%s1471 + $0x10] sm:$0xff]
        %v1475 = vld [vmem:[%s1471 + $0x18] sm:$0xff]
        %v1476 = vld [vmem:[%s1471 + $0x20] sm:$0xff]
        %v1477 = vld [vmem:[%s1471 + $0x28] sm:$0xff]
        %v1478 = vld [vmem:[%s1471 + $0x30] sm:$0xff]
        %v1479 = vld [vmem:[%s1471 + $0x38] sm:$0xff]
        %v1480 = vld [vmem:[%s1471 + $0x40] sm:$0xff]
        %v1481 = vld [vmem:[%s1471 + $0x48] sm:$0xff]
        %v1482 = vld [vmem:[%s1471 + $0x50] sm:$0xff]
        %v1483 = vld [vmem:[%s1471 + $0x58] sm:$0xff]
        %v1484 = vld [vmem:[%s1471 + $0x60] sm:$0xff]
        %v1485 = vld [vmem:[%s1471 + $0x68] sm:$0xff]
        %v1486 = vld [vmem:[%s1471 + $0x70] sm:$0xff]
        %v1487 = vld [vmem:[%s1471 + $0x78] sm:$0xff]
        %v1488 = vrot.slane %v1124, 1
        %v1489 = vrot.slane %v1126, 2
        %v1490 = vor.u32 %v1488, %v1489
        %v1508 = vunpack.c.l.b16 %v1472
        %v1509 = vunpack.c.h.b16 %v1472
        %v1510 = vunpack.c.l.b16 %v1473
        %v1511 = vunpack.c.h.b16 %v1473
        %v1512 = vunpack.c.l.b16 %v1474
        %v1513 = vunpack.c.h.b16 %v1474
        %v1514 = vunpack.c.l.b16 %v1475
        %v1515 = vunpack.c.h.b16 %v1475
        %v1516 = vunpack.c.l.b16 %v1476
        %v1517 = vunpack.c.h.b16 %v1476
        %v1518 = vunpack.c.l.b16 %v1477
        %v1519 = vunpack.c.h.b16 %v1477
        %v1520 = vunpack.c.l.b16 %v1478
        %v1521 = vunpack.c.h.b16 %v1478
        %v1522 = vunpack.c.l.b16 %v1479
        %v1523 = vunpack.c.h.b16 %v1479
        %v1524 = vunpack.c.l.b16 %v1480
        %v1525 = vunpack.c.h.b16 %v1480
        %v1526 = vunpack.c.l.b16 %v1481
        %v1527 = vunpack.c.h.b16 %v1481
        %v1528 = vunpack.c.l.b16 %v1482
        %v1529 = vunpack.c.h.b16 %v1482
        %v1530 = vunpack.c.l.b16 %v1483
        %v1531 = vunpack.c.h.b16 %v1483
        %v1532 = vunpack.c.l.b16 %v1484
        %v1533 = vunpack.c.h.b16 %v1484
        %v1534 = vunpack.c.l.b16 %v1485
        %v1535 = vunpack.c.h.b16 %v1485
        %v1536 = vunpack.c.l.b16 %v1486
        %v1537 = vunpack.c.h.b16 %v1486
        %v1538 = vunpack.c.l.b16 %v1487
        %v1539 = vunpack.c.h.b16 %v1487
        %v1540 = vpack.c.b16 %v1510, %v1508
        %v1541 = vpack.c.b16 %v1511, %v1509
        %v1542 = vpack.c.b16 %v1514, %v1512
        %v1543 = vpack.c.b16 %v1515, %v1513
        %v1544 = vpack.c.b16 %v1518, %v1516
        %v1545 = vpack.c.b16 %v1519, %v1517
        %v1546 = vpack.c.b16 %v1522, %v1520
        %v1547 = vpack.c.b16 %v1523, %v1521
        %v1548 = vpack.c.b16 %v1526, %v1524
        %v1549 = vpack.c.b16 %v1527, %v1525
        %v1550 = vpack.c.b16 %v1530, %v1528
        %v1551 = vpack.c.b16 %v1531, %v1529
        %v1552 = vpack.c.b16 %v1534, %v1532
        %v1553 = vpack.c.b16 %v1535, %v1533
        %v1554 = vpack.c.b16 %v1538, %v1536
        %v1555 = vpack.c.b16 %v1539, %v1537
        %1572 = vmatpush.bf16.msra.mxu0 %v1554
        %1573 = vmatpush.bf16.msra.mxu0 %v1552
        %1574 = vmatpush.bf16.msra.mxu0 %v1550
        %1575 = vmatpush.bf16.msra.mxu0 %v1548
        %1576 = vmatpush.bf16.msra.mxu0 %v1546
        %1577 = vmatpush.bf16.msra.mxu0 %v1544
        %1578 = vmatpush.bf16.msra.mxu0 %v1542
        %1579 = vmatpush.bf16.msra.mxu0 %v1540
        %1580 = vmatmul.bf16.gmra.mxu0 %v1490
        %v1581 = vpop.f32.mrf.mxu0
        %v1582 = vadd.f32 0.0, %v1581
        %v1583 = vpop.f32.mrf.mxu0
        %1584 = vdwg.mxu0
        %1585 = vmatpush.bf16.msra.mxu0 %v1555
        %1586 = vmatpush.bf16.msra.mxu0 %v1553
        %1587 = vmatpush.bf16.msra.mxu0 %v1551
        %1588 = vmatpush.bf16.msra.mxu0 %v1549
        %1589 = vmatpush.bf16.msra.mxu0 %v1547
        %1590 = vmatpush.bf16.msra.mxu0 %v1545
        %1591 = vmatpush.bf16.msra.mxu0 %v1543
        %1592 = vmatpush.bf16.msra.mxu0 %v1541
        %1593 = vmatmul.bf16.gmra.mxu0 %v1490
        %v1594 = vpop.f32.mrf.mxu0
        %v1595 = vadd.f32 0.0, %v1594
        %v1596 = vpop.f32.mrf.mxu0
        %1597 = vdwg.mxu0
        %v1598 = vadd.f32 %v1469, %v1582
        %v1599 = vadd.f32 %v1470, %v1595
        %s1600 = scalar_lea.vmem [#allocation8], 512
        %v1601 = vld [vmem:[%s1600] sm:$0xff]
        %v1602 = vld [vmem:[%s1600 + $0x8] sm:$0xff]
        %v1603 = vld [vmem:[%s1600 + $0x10] sm:$0xff]
        %v1604 = vld [vmem:[%s1600 + $0x18] sm:$0xff]
        %v1605 = vld [vmem:[%s1600 + $0x20] sm:$0xff]
        %v1606 = vld [vmem:[%s1600 + $0x28] sm:$0xff]
        %v1607 = vld [vmem:[%s1600 + $0x30] sm:$0xff]
        %v1608 = vld [vmem:[%s1600 + $0x38] sm:$0xff]
        %v1609 = vld [vmem:[%s1600 + $0x40] sm:$0xff]
        %v1610 = vld [vmem:[%s1600 + $0x48] sm:$0xff]
        %v1611 = vld [vmem:[%s1600 + $0x50] sm:$0xff]
        %v1612 = vld [vmem:[%s1600 + $0x58] sm:$0xff]
        %v1613 = vld [vmem:[%s1600 + $0x60] sm:$0xff]
        %v1614 = vld [vmem:[%s1600 + $0x68] sm:$0xff]
        %v1615 = vld [vmem:[%s1600 + $0x70] sm:$0xff]
        %v1616 = vld [vmem:[%s1600 + $0x78] sm:$0xff]
        %v1617 = vrot.slane %v1105, 2
        %v1635 = vunpack.c.l.b16 %v1601
        %v1636 = vunpack.c.h.b16 %v1601
        %v1637 = vunpack.c.l.b16 %v1602
        %v1638 = vunpack.c.h.b16 %v1602
        %v1639 = vunpack.c.l.b16 %v1603
        %v1640 = vunpack.c.h.b16 %v1603
        %v1641 = vunpack.c.l.b16 %v1604
        %v1642 = vunpack.c.h.b16 %v1604
        %v1643 = vunpack.c.l.b16 %v1605
        %v1644 = vunpack.c.h.b16 %v1605
        %v1645 = vunpack.c.l.b16 %v1606
        %v1646 = vunpack.c.h.b16 %v1606
        %v1647 = vunpack.c.l.b16 %v1607
        %v1648 = vunpack.c.h.b16 %v1607
        %v1649 = vunpack.c.l.b16 %v1608
        %v1650 = vunpack.c.h.b16 %v1608
        %v1651 = vunpack.c.l.b16 %v1609
        %v1652 = vunpack.c.h.b16 %v1609
        %v1653 = vunpack.c.l.b16 %v1610
        %v1654 = vunpack.c.h.b16 %v1610
        %v1655 = vunpack.c.l.b16 %v1611
        %v1656 = vunpack.c.h.b16 %v1611
        %v1657 = vunpack.c.l.b16 %v1612
        %v1658 = vunpack.c.h.b16 %v1612
        %v1659 = vunpack.c.l.b16 %v1613
        %v1660 = vunpack.c.h.b16 %v1613
        %v1661 = vunpack.c.l.b16 %v1614
        %v1662 = vunpack.c.h.b16 %v1614
        %v1663 = vunpack.c.l.b16 %v1615
        %v1664 = vunpack.c.h.b16 %v1615
        %v1665 = vunpack.c.l.b16 %v1616
        %v1666 = vunpack.c.h.b16 %v1616
        %v1667 = vpack.c.b16 %v1637, %v1635
        %v1668 = vpack.c.b16 %v1638, %v1636
        %v1669 = vpack.c.b16 %v1641, %v1639
        %v1670 = vpack.c.b16 %v1642, %v1640
        %v1671 = vpack.c.b16 %v1645, %v1643
        %v1672 = vpack.c.b16 %v1646, %v1644
        %v1673 = vpack.c.b16 %v1649, %v1647
        %v1674 = vpack.c.b16 %v1650, %v1648
        %v1675 = vpack.c.b16 %v1653, %v1651
        %v1676 = vpack.c.b16 %v1654, %v1652
        %v1677 = vpack.c.b16 %v1657, %v1655
        %v1678 = vpack.c.b16 %v1658, %v1656
        %v1679 = vpack.c.b16 %v1661, %v1659
        %v1680 = vpack.c.b16 %v1662, %v1660
        %v1681 = vpack.c.b16 %v1665, %v1663
        %v1682 = vpack.c.b16 %v1666, %v1664
        %1699 = vmatpush.bf16.msra.mxu0 %v1681
        %1700 = vmatpush.bf16.msra.mxu0 %v1679
        %1701 = vmatpush.bf16.msra.mxu0 %v1677
        %1702 = vmatpush.bf16.msra.mxu0 %v1675
        %1703 = vmatpush.bf16.msra.mxu0 %v1673
        %1704 = vmatpush.bf16.msra.mxu0 %v1671
        %1705 = vmatpush.bf16.msra.mxu0 %v1669
        %1706 = vmatpush.bf16.msra.mxu0 %v1667
        %1707 = vmatmul.bf16.gmra.mxu0 %v1617
        %v1708 = vpop.f32.mrf.mxu0
        %v1709 = vadd.f32 0.0, %v1708
        %v1710 = vpop.f32.mrf.mxu0
        %1711 = vdwg.mxu0
        %1712 = vmatpush.bf16.msra.mxu0 %v1682
        %1713 = vmatpush.bf16.msra.mxu0 %v1680
        %1714 = vmatpush.bf16.msra.mxu0 %v1678
        %1715 = vmatpush.bf16.msra.mxu0 %v1676
        %1716 = vmatpush.bf16.msra.mxu0 %v1674
        %1717 = vmatpush.bf16.msra.mxu0 %v1672
        %1718 = vmatpush.bf16.msra.mxu0 %v1670
        %1719 = vmatpush.bf16.msra.mxu0 %v1668
        %1720 = vmatmul.bf16.gmra.mxu0 %v1617
        %v1721 = vpop.f32.mrf.mxu0
        %v1722 = vadd.f32 0.0, %v1721
        %v1723 = vpop.f32.mrf.mxu0
        %1724 = vdwg.mxu0
        %v1725 = vadd.f32 %v1598, %v1709
        %v1726 = vadd.f32 %v1599, %v1722
        %v1727 = vld [vmem:[#allocation9] sm:$0x3]
        %v1729 = vperm.slane %v1727, 0
        %v1730 = vperm.slane %v1727, 1
        %v1733 = vadd.f32 %v1725, %v1729
        %v1734 = vadd.f32 %v1726, %v1730
        %v1735 = vmax.f32 %v1733, 0.0
        %v1736 = vmax.f32 %v1734, 0.0
        %v1737 = vmax.f32 %v1735, %v1736
        %v1738 = vpack.c.bf16 %v1737, %v1737
        %v1739 = vld [vmem:[#allocation11] sm:$0x3]
        %vm1740 = vcmask 64512
        %v1742 = vsel %vm1740, %v1739, 0
        %v1745 = vsel %vm1043, %v1738, 0
        %1747 = vmatpush.bf16.msra.mxu0 0
        %1748 = vmatpush.bf16.msra.mxu0 0
        %1749 = vmatpush.bf16.msra.mxu0 0
        %1750 = vmatpush.bf16.msra.mxu0 0
        %1751 = vmatpush.bf16.msra.mxu0 0
        %1752 = vmatpush.bf16.msra.mxu0 0
        %1753 = vmatpush.bf16.msra.mxu0 0
        %1754 = vmatpush.bf16.msra.mxu0 %v1745
        %1755 = vmatmul.bf16.gmra.mxu0 %v1742
        %v1756 = vpop.f32.mrf.mxu0
        %v1757 = vadd.f32 0.0, %v1756
        %v1758 = vpop.f32.mrf.mxu0
        %1759 = vdwg.mxu0
        %s1760 = scalar_lea.vmem [#allocation11], 2
        %v1761 = vld [vmem:[%s1760] sm:$0x3]
        %v1763 = vsel %vm1740, %v1761, 0
        %1765 = vmatpush.bf16.msra.mxu0 0
        %1766 = vmatpush.bf16.msra.mxu0 0
        %1767 = vmatpush.bf16.msra.mxu0 0
        %1768 = vmatpush.bf16.msra.mxu0 0
        %1769 = vmatpush.bf16.msra.mxu0 0
        %1770 = vmatpush.bf16.msra.mxu0 0
        %1771 = vmatpush.bf16.msra.mxu0 0
        %1772 = vmatpush.bf16.msra.mxu0 %v1745
        %1773 = vmatmul.bf16.gmra.mxu0 %v1763
        %v1774 = vpop.f32.mrf.mxu0
        %v1775 = vadd.f32 0.0, %v1774
        %v1776 = vpop.f32.mrf.mxu0
        %1777 = vdwg.mxu0
        %v1778 = vmax.f32 %v1757, %v1775
        %v1779 = vpack.c.bf16 %v1778, %v1778
        %vm1780 = vcmask 1040384
        %vm1781 = vsmask.f32 256
        %vm1782 = vmand %vm1780, %vm1781
        %v1783 = vld [vmem:[#allocation2] sm:$0x1]
        %v1784 = vsel %vm1782, %v1779, %v1783
        %1785 = vst [vmem:[#allocation2] sm:$0x1] %v1784
        %v1787 = vrot.slane %v1779, 3
        %vm1788 = vcmask 1040384
        %v1791 = vsel %vm1788, %v1779, %v1787
        %v1792 = vshrl.u32 %v1791, 16
        %v1794 = vrot.slane %v1792, 7
        %v1795 = vrot.slane %v1794, 1
        %s1797 = scalar_lea.vmem [#allocation2], 1
        %v1798 = vld [vmem:[%s1797] sm:$0x1]
        %v1799 = vsel %vm1782, %v1795, %v1798
        %1800 = vst [vmem:[%s1797] sm:$0x1] %v1799
        %1801 = vst [vmem:[#allocation1] sm:$0xff] %v1779
        %s1802 = scalar_lea.vmem [#allocation1], 1
        %v1803 = vld [vmem:[%s1802] ss:$4 sm:$0xff]
        %s1805 = scalar_lea.vmem [#allocation2], 2
        %v1806 = vld [vmem:[%s1805] sm:$0x1]
        %v1807 = vsel %vm1782, %v1803, %v1806
        %1808 = vst [vmem:[%s1805] sm:$0x1] %v1807
        %1809 = vst [vmem:[#allocation1] sm:$0xff] %v1779
        %s1810 = scalar_lea.vmem [#allocation1], 1
        %v1811 = vld [vmem:[%s1810] ss:$4 sm:$0xff]
        %v1812 = vshrl.u32 %v1811, 16
        %v1814 = vrot.slane %v1812, 7
        %v1815 = vrot.slane %v1814, 1
        %s1817 = scalar_lea.vmem [#allocation2], 3
        %v1818 = vld [vmem:[%s1817] sm:$0x1]
        %v1819 = vsel %vm1782, %v1815, %v1818
        %1820 = vst [vmem:[%s1817] sm:$0x1] %v1819
        %v1821 = vld [vmem:[#allocation2] sm:$0x1]
        %v1822 = vld [vmem:[%s7] sm:$0xf]
        %v1823 = vld [vmem:[%s7 + $0x4] sm:$0xf]
        %v1824 = vld [vmem:[%s7 + $0x8] sm:$0xf]
        %v1825 = vld [vmem:[%s7 + $0xc] sm:$0xf]
        %v1826 = vld [vmem:[%s7 + $0x10] sm:$0xf]
        %v1827 = vld [vmem:[%s7 + $0x14] sm:$0xf]
        %v1828 = vld [vmem:[%s7 + $0x18] sm:$0xf]
        %v1829 = vld [vmem:[%s7 + $0x1c] sm:$0xf]
        %v1830 = vld [vmem:[%s7 + $0x20] sm:$0xf]
        %v1831 = vld [vmem:[%s7 + $0x24] sm:$0xf]
        %v1832 = vld [vmem:[%s7 + $0x28] sm:$0xf]
        %v1833 = vld [vmem:[%s7 + $0x2c] sm:$0xf]
        %v1834 = vld [vmem:[%s7 + $0x30] sm:$0xf]
        %v1835 = vld [vmem:[%s7 + $0x34] sm:$0xf]
        %v1836 = vld [vmem:[%s7 + $0x38] sm:$0xf]
        %v1837 = vld [vmem:[%s7 + $0x3c] sm:$0xf]
        %v1838 = vld [vmem:[%s1797] sm:$0x1]
        %s1839 = scalar_lea.vmem %s7, 64
        %v1840 = vld [vmem:[%s1839] sm:$0xf]
        %v1841 = vld [vmem:[%s1839 + $0x4] sm:$0xf]
        %v1842 = vld [vmem:[%s1839 + $0x8] sm:$0xf]
        %v1843 = vld [vmem:[%s1839 + $0xc] sm:$0xf]
        %v1844 = vld [vmem:[%s1839 + $0x10] sm:$0xf]
        %v1845 = vld [vmem:[%s1839 + $0x14] sm:$0xf]
        %v1846 = vld [vmem:[%s1839 + $0x18] sm:$0xf]
        %v1847 = vld [vmem:[%s1839 + $0x1c] sm:$0xf]
        %v1848 = vld [vmem:[%s1839 + $0x20] sm:$0xf]
        %v1849 = vld [vmem:[%s1839 + $0x24] sm:$0xf]
        %v1850 = vld [vmem:[%s1839 + $0x28] sm:$0xf]
        %v1851 = vld [vmem:[%s1839 + $0x2c] sm:$0xf]
        %v1852 = vld [vmem:[%s1839 + $0x30] sm:$0xf]
        %v1853 = vld [vmem:[%s1839 + $0x34] sm:$0xf]
        %v1854 = vld [vmem:[%s1839 + $0x38] sm:$0xf]
        %v1855 = vld [vmem:[%s1839 + $0x3c] sm:$0xf]
        %v1872 = vunpack.c.l.b16 %v1840
        %v1873 = vunpack.c.l.b16 %v1841
        %v1874 = vunpack.c.l.b16 %v1842
        %v1875 = vunpack.c.l.b16 %v1843
        %v1876 = vunpack.c.l.b16 %v1844
        %v1877 = vunpack.c.l.b16 %v1845
        %v1878 = vunpack.c.l.b16 %v1846
        %v1879 = vunpack.c.l.b16 %v1847
        %v1880 = vunpack.c.l.b16 %v1848
        %v1881 = vunpack.c.l.b16 %v1849
        %v1882 = vunpack.c.l.b16 %v1850
        %v1883 = vunpack.c.l.b16 %v1851
        %v1884 = vunpack.c.l.b16 %v1852
        %v1885 = vunpack.c.l.b16 %v1853
        %v1886 = vunpack.c.l.b16 %v1854
        %v1887 = vunpack.c.l.b16 %v1855
        %v1888 = vpack.c.b16 %v1873, %v1872
        %v1889 = vpack.c.b16 %v1875, %v1874
        %v1890 = vpack.c.b16 %v1877, %v1876
        %v1891 = vpack.c.b16 %v1879, %v1878
        %v1892 = vpack.c.b16 %v1881, %v1880
        %v1893 = vpack.c.b16 %v1883, %v1882
        %v1894 = vpack.c.b16 %v1885, %v1884
        %v1895 = vpack.c.b16 %v1887, %v1886
        %1904 = vmatpush.bf16.msra.mxu0 %v1895
        %1905 = vmatpush.bf16.msra.mxu0 %v1894
        %1906 = vmatpush.bf16.msra.mxu0 %v1893
        %1907 = vmatpush.bf16.msra.mxu0 %v1892
        %1908 = vmatpush.bf16.msra.mxu0 %v1891
        %1909 = vmatpush.bf16.msra.mxu0 %v1890
        %1910 = vmatpush.bf16.msra.mxu0 %v1889
        %1911 = vmatpush.bf16.msra.mxu0 %v1888
        %1912 = vmatmul.bf16.gmra.mxu0 %v1838
        %v1913 = vpop.f32.mrf.mxu0
        %v1914 = vadd.f32 0.0, %v1913
        %v1915 = vpop.f32.mrf.mxu0
        %1916 = vdwg.mxu0
        %v1933 = vunpack.c.l.b16 %v1822
        %v1934 = vunpack.c.l.b16 %v1823
        %v1935 = vunpack.c.l.b16 %v1824
        %v1936 = vunpack.c.l.b16 %v1825
        %v1937 = vunpack.c.l.b16 %v1826
        %v1938 = vunpack.c.l.b16 %v1827
        %v1939 = vunpack.c.l.b16 %v1828
        %v1940 = vunpack.c.l.b16 %v1829
        %v1941 = vunpack.c.l.b16 %v1830
        %v1942 = vunpack.c.l.b16 %v1831
        %v1943 = vunpack.c.l.b16 %v1832
        %v1944 = vunpack.c.l.b16 %v1833
        %v1945 = vunpack.c.l.b16 %v1834
        %v1946 = vunpack.c.l.b16 %v1835
        %v1947 = vunpack.c.l.b16 %v1836
        %v1948 = vunpack.c.l.b16 %v1837
        %v1949 = vpack.c.b16 %v1934, %v1933
        %v1950 = vpack.c.b16 %v1936, %v1935
        %v1951 = vpack.c.b16 %v1938, %v1937
        %v1952 = vpack.c.b16 %v1940, %v1939
        %v1953 = vpack.c.b16 %v1942, %v1941
        %v1954 = vpack.c.b16 %v1944, %v1943
        %v1955 = vpack.c.b16 %v1946, %v1945
        %v1956 = vpack.c.b16 %v1948, %v1947
        %1965 = vmatpush.bf16.msra.mxu0 %v1956
        %1966 = vmatpush.bf16.msra.mxu0 %v1955
        %1967 = vmatpush.bf16.msra.mxu0 %v1954
        %1968 = vmatpush.bf16.msra.mxu0 %v1953
        %1969 = vmatpush.bf16.msra.mxu0 %v1952
        %1970 = vmatpush.bf16.msra.mxu0 %v1951
        %1971 = vmatpush.bf16.msra.mxu0 %v1950
        %1972 = vmatpush.bf16.msra.mxu0 %v1949
        %1973 = vmatmul.bf16.gmra.mxu0 %v1821
        %v1974 = vpop.f32.mrf.mxu0
        %v1975 = vadd.f32 %v1914, %v1974
        %v1976 = vpop.f32.mrf.mxu0
        %1977 = vdwg.mxu0
        %v1978 = vld [vmem:[%s1805] sm:$0x1]
        %s1979 = scalar_lea.vmem %s7, 128
        %v1980 = vld [vmem:[%s1979] sm:$0xf]
        %v1981 = vld [vmem:[%s1979 + $0x4] sm:$0xf]
        %v1982 = vld [vmem:[%s1979 + $0x8] sm:$0xf]
        %v1983 = vld [vmem:[%s1979 + $0xc] sm:$0xf]
        %v1984 = vld [vmem:[%s1979 + $0x10] sm:$0xf]
        %v1985 = vld [vmem:[%s1979 + $0x14] sm:$0xf]
        %v1986 = vld [vmem:[%s1979 + $0x18] sm:$0xf]
        %v1987 = vld [vmem:[%s1979 + $0x1c] sm:$0xf]
        %v1988 = vld [vmem:[%s1979 + $0x20] sm:$0xf]
        %v1989 = vld [vmem:[%s1979 + $0x24] sm:$0xf]
        %v1990 = vld [vmem:[%s1979 + $0x28] sm:$0xf]
        %v1991 = vld [vmem:[%s1979 + $0x2c] sm:$0xf]
        %v1992 = vld [vmem:[%s1979 + $0x30] sm:$0xf]
        %v1993 = vld [vmem:[%s1979 + $0x34] sm:$0xf]
        %v1994 = vld [vmem:[%s1979 + $0x38] sm:$0xf]
        %v1995 = vld [vmem:[%s1979 + $0x3c] sm:$0xf]
        %v2012 = vunpack.c.l.b16 %v1980
        %v2013 = vunpack.c.l.b16 %v1981
        %v2014 = vunpack.c.l.b16 %v1982
        %v2015 = vunpack.c.l.b16 %v1983
        %v2016 = vunpack.c.l.b16 %v1984
        %v2017 = vunpack.c.l.b16 %v1985
        %v2018 = vunpack.c.l.b16 %v1986
        %v2019 = vunpack.c.l.b16 %v1987
        %v2020 = vunpack.c.l.b16 %v1988
        %v2021 = vunpack.c.l.b16 %v1989
        %v2022 = vunpack.c.l.b16 %v1990
        %v2023 = vunpack.c.l.b16 %v1991
        %v2024 = vunpack.c.l.b16 %v1992
        %v2025 = vunpack.c.l.b16 %v1993
        %v2026 = vunpack.c.l.b16 %v1994
        %v2027 = vunpack.c.l.b16 %v1995
        %v2028 = vpack.c.b16 %v2013, %v2012
        %v2029 = vpack.c.b16 %v2015, %v2014
        %v2030 = vpack.c.b16 %v2017, %v2016
        %v2031 = vpack.c.b16 %v2019, %v2018
        %v2032 = vpack.c.b16 %v2021, %v2020
        %v2033 = vpack.c.b16 %v2023, %v2022
        %v2034 = vpack.c.b16 %v2025, %v2024
        %v2035 = vpack.c.b16 %v2027, %v2026
        %2044 = vmatpush.bf16.msra.mxu0 %v2035
        %2045 = vmatpush.bf16.msra.mxu0 %v2034
        %2046 = vmatpush.bf16.msra.mxu0 %v2033
        %2047 = vmatpush.bf16.msra.mxu0 %v2032
        %2048 = vmatpush.bf16.msra.mxu0 %v2031
        %2049 = vmatpush.bf16.msra.mxu0 %v2030
        %2050 = vmatpush.bf16.msra.mxu0 %v2029
        %2051 = vmatpush.bf16.msra.mxu0 %v2028
        %2052 = vmatmul.bf16.gmra.mxu0 %v1978
        %v2053 = vpop.f32.mrf.mxu0
        %v2054 = vadd.f32 0.0, %v2053
        %v2055 = vpop.f32.mrf.mxu0
        %2056 = vdwg.mxu0
        %v2057 = vadd.f32 %v1975, %v2054
        %v2058 = vld [vmem:[%s1817] sm:$0x1]
        %s2059 = scalar_lea.vmem %s7, 192
        %v2060 = vld [vmem:[%s2059] sm:$0xf]
        %v2061 = vld [vmem:[%s2059 + $0x4] sm:$0xf]
        %v2062 = vld [vmem:[%s2059 + $0x8] sm:$0xf]
        %v2063 = vld [vmem:[%s2059 + $0xc] sm:$0xf]
        %v2064 = vld [vmem:[%s2059 + $0x10] sm:$0xf]
        %v2065 = vld [vmem:[%s2059 + $0x14] sm:$0xf]
        %v2066 = vld [vmem:[%s2059 + $0x18] sm:$0xf]
        %v2067 = vld [vmem:[%s2059 + $0x1c] sm:$0xf]
        %v2068 = vld [vmem:[%s2059 + $0x20] sm:$0xf]
        %v2069 = vld [vmem:[%s2059 + $0x24] sm:$0xf]
        %v2070 = vld [vmem:[%s2059 + $0x28] sm:$0xf]
        %v2071 = vld [vmem:[%s2059 + $0x2c] sm:$0xf]
        %v2072 = vld [vmem:[%s2059 + $0x30] sm:$0xf]
        %v2073 = vld [vmem:[%s2059 + $0x34] sm:$0xf]
        %v2074 = vld [vmem:[%s2059 + $0x38] sm:$0xf]
        %v2075 = vld [vmem:[%s2059 + $0x3c] sm:$0xf]
        %v2092 = vunpack.c.l.b16 %v2060
        %v2093 = vunpack.c.l.b16 %v2061
        %v2094 = vunpack.c.l.b16 %v2062
        %v2095 = vunpack.c.l.b16 %v2063
        %v2096 = vunpack.c.l.b16 %v2064
        %v2097 = vunpack.c.l.b16 %v2065
        %v2098 = vunpack.c.l.b16 %v2066
        %v2099 = vunpack.c.l.b16 %v2067
        %v2100 = vunpack.c.l.b16 %v2068
        %v2101 = vunpack.c.l.b16 %v2069
        %v2102 = vunpack.c.l.b16 %v2070
        %v2103 = vunpack.c.l.b16 %v2071
        %v2104 = vunpack.c.l.b16 %v2072
        %v2105 = vunpack.c.l.b16 %v2073
        %v2106 = vunpack.c.l.b16 %v2074
        %v2107 = vunpack.c.l.b16 %v2075
        %v2108 = vpack.c.b16 %v2093, %v2092
        %v2109 = vpack.c.b16 %v2095, %v2094
        %v2110 = vpack.c.b16 %v2097, %v2096
        %v2111 = vpack.c.b16 %v2099, %v2098
        %v2112 = vpack.c.b16 %v2101, %v2100
        %v2113 = vpack.c.b16 %v2103, %v2102
        %v2114 = vpack.c.b16 %v2105, %v2104
        %v2115 = vpack.c.b16 %v2107, %v2106
        %2124 = vmatpush.bf16.msra.mxu0 %v2115
        %2125 = vmatpush.bf16.msra.mxu0 %v2114
        %2126 = vmatpush.bf16.msra.mxu0 %v2113
        %2127 = vmatpush.bf16.msra.mxu0 %v2112
        %2128 = vmatpush.bf16.msra.mxu0 %v2111
        %2129 = vmatpush.bf16.msra.mxu0 %v2110
        %2130 = vmatpush.bf16.msra.mxu0 %v2109
        %2131 = vmatpush.bf16.msra.mxu0 %v2108
        %2132 = vmatmul.bf16.gmra.mxu0 %v2058
        %v2133 = vpop.f32.mrf.mxu0
        %v2134 = vadd.f32 0.0, %v2133
        %v2135 = vpop.f32.mrf.mxu0
        %2136 = vdwg.mxu0
        %v2137 = vadd.f32 %v2057, %v2134
        %v2138 = vld [vmem:[#allocation12] sm:$0x1]
        %v2139 = vadd.f32 %v2137, %v2138
        %v2140 = vmax.f32 %v2139, 0.0
        %v2141 = vpack.c.bf16 %v2140, %v2140
        %v2142 = vld [vmem:[#allocation14] sm:$0xf]
        %v2143 = vld [vmem:[#allocation14 + $0x4] sm:$0xf]
        %v2144 = vld [vmem:[#allocation14 + $0x8] sm:$0xf]
        %v2145 = vld [vmem:[#allocation14 + $0xc] sm:$0xf]
        %v2146 = vld [vmem:[#allocation14 + $0x10] sm:$0xf]
        %v2147 = vld [vmem:[#allocation14 + $0x14] sm:$0xf]
        %v2148 = vld [vmem:[#allocation14 + $0x18] sm:$0xf]
        %v2149 = vld [vmem:[#allocation14 + $0x1c] sm:$0xf]
        %v2150 = vld [vmem:[#allocation14 + $0x20] sm:$0xf]
        %v2151 = vld [vmem:[#allocation14 + $0x24] sm:$0xf]
        %v2152 = vld [vmem:[#allocation14 + $0x28] sm:$0xf]
        %v2153 = vld [vmem:[#allocation14 + $0x2c] sm:$0xf]
        %v2154 = vld [vmem:[#allocation14 + $0x30] sm:$0xf]
        %v2155 = vld [vmem:[#allocation14 + $0x34] sm:$0xf]
        %v2156 = vld [vmem:[#allocation14 + $0x38] sm:$0xf]
        %v2157 = vld [vmem:[#allocation14 + $0x3c] sm:$0xf]
        %v2158 = vld [vmem:[#allocation15] sm:$0x1]
        %v2175 = vunpack.c.l.b16 %v2142
        %v2176 = vunpack.c.l.b16 %v2143
        %v2177 = vunpack.c.l.b16 %v2144
        %v2178 = vunpack.c.l.b16 %v2145
        %v2179 = vunpack.c.l.b16 %v2146
        %v2180 = vunpack.c.l.b16 %v2147
        %v2181 = vunpack.c.l.b16 %v2148
        %v2182 = vunpack.c.l.b16 %v2149
        %v2183 = vunpack.c.l.b16 %v2150
        %v2184 = vunpack.c.l.b16 %v2151
        %v2185 = vunpack.c.l.b16 %v2152
        %v2186 = vunpack.c.l.b16 %v2153
        %v2187 = vunpack.c.l.b16 %v2154
        %v2188 = vunpack.c.l.b16 %v2155
        %v2189 = vunpack.c.l.b16 %v2156
        %v2190 = vunpack.c.l.b16 %v2157
        %v2191 = vpack.c.b16 %v2176, %v2175
        %v2192 = vpack.c.b16 %v2178, %v2177
        %v2193 = vpack.c.b16 %v2180, %v2179
        %v2194 = vpack.c.b16 %v2182, %v2181
        %v2195 = vpack.c.b16 %v2184, %v2183
        %v2196 = vpack.c.b16 %v2186, %v2185
        %v2197 = vpack.c.b16 %v2188, %v2187
        %v2198 = vpack.c.b16 %v2190, %v2189
        %2207 = vmatpush.bf16.msra.mxu0 %v2198
        %2208 = vmatpush.bf16.msra.mxu0 %v2197
        %2209 = vmatpush.bf16.msra.mxu0 %v2196
        %2210 = vmatpush.bf16.msra.mxu0 %v2195
        %2211 = vmatpush.bf16.msra.mxu0 %v2194
        %2212 = vmatpush.bf16.msra.mxu0 %v2193
        %2213 = vmatpush.bf16.msra.mxu0 %v2192
        %2214 = vmatpush.bf16.msra.mxu0 %v2191
        %2215 = vmatmul.bf16.gmra.mxu0 %v2141
        %v2216 = vpop.f32.mrf.mxu0
        %v2217 = vadd.f32 %v2158, %v2216
        %v2218 = vpop.f32.mrf.mxu0
        %2219 = vdwg.mxu0
        %v2220 = vmax.f32 %v2217, 0.0
        %v2221 = vpack.c.bf16 %v2220, %v2220
        %v2222 = vld [vmem:[#allocation17] sm:$0xf]
        %v2223 = vld [vmem:[#allocation17 + $0x4] sm:$0xf]
        %v2224 = vld [vmem:[#allocation17 + $0x8] sm:$0xf]
        %v2225 = vld [vmem:[#allocation17 + $0xc] sm:$0xf]
        %v2226 = vld [vmem:[#allocation17 + $0x10] sm:$0xf]
        %v2227 = vld [vmem:[#allocation17 + $0x14] sm:$0xf]
        %v2228 = vld [vmem:[#allocation17 + $0x18] sm:$0xf]
        %v2229 = vld [vmem:[#allocation17 + $0x1c] sm:$0xf]
        %v2230 = vld [vmem:[#allocation17 + $0x20] sm:$0xf]
        %v2231 = vld [vmem:[#allocation17 + $0x24] sm:$0xf]
        %v2232 = vld [vmem:[#allocation17 + $0x28] sm:$0xf]
        %v2233 = vld [vmem:[#allocation17 + $0x2c] sm:$0xf]
        %v2234 = vld [vmem:[#allocation17 + $0x30] sm:$0xf]
        %v2235 = vld [vmem:[#allocation17 + $0x34] sm:$0xf]
        %v2236 = vld [vmem:[#allocation17 + $0x38] sm:$0xf]
        %v2237 = vld [vmem:[#allocation17 + $0x3c] sm:$0xf]
        %v2238 = vld [vmem:[#allocation18] sm:$0x1]
        %v2255 = vunpack.c.l.b16 %v2222
        %v2256 = vunpack.c.l.b16 %v2223
        %v2257 = vunpack.c.l.b16 %v2224
        %v2258 = vunpack.c.l.b16 %v2225
        %v2259 = vunpack.c.l.b16 %v2226
        %v2260 = vunpack.c.l.b16 %v2227
        %v2261 = vunpack.c.l.b16 %v2228
        %v2262 = vunpack.c.l.b16 %v2229
        %v2263 = vunpack.c.l.b16 %v2230
        %v2264 = vunpack.c.l.b16 %v2231
        %v2265 = vunpack.c.l.b16 %v2232
        %v2266 = vunpack.c.l.b16 %v2233
        %v2267 = vunpack.c.l.b16 %v2234
        %v2268 = vunpack.c.l.b16 %v2235
        %v2269 = vunpack.c.l.b16 %v2236
        %v2270 = vunpack.c.l.b16 %v2237
        %v2271 = vpack.c.b16 %v2256, %v2255
        %v2272 = vpack.c.b16 %v2258, %v2257
        %v2273 = vpack.c.b16 %v2260, %v2259
        %v2274 = vpack.c.b16 %v2262, %v2261
        %v2275 = vpack.c.b16 %v2264, %v2263
        %v2276 = vpack.c.b16 %v2266, %v2265
        %v2277 = vpack.c.b16 %v2268, %v2267
        %v2278 = vpack.c.b16 %v2270, %v2269
        %2287 = vmatpush.bf16.msra.mxu0 %v2278
        %2288 = vmatpush.bf16.msra.mxu0 %v2277
        %2289 = vmatpush.bf16.msra.mxu0 %v2276
        %2290 = vmatpush.bf16.msra.mxu0 %v2275
        %2291 = vmatpush.bf16.msra.mxu0 %v2274
        %2292 = vmatpush.bf16.msra.mxu0 %v2273
        %2293 = vmatpush.bf16.msra.mxu0 %v2272
        %2294 = vmatpush.bf16.msra.mxu0 %v2271
        %2295 = vmatmul.bf16.gmra.mxu0 %v2221
        %v2296 = vpop.f32.mrf.mxu0
        %v2297 = vadd.f32 %v2238, %v2296
        %v2298 = vpop.f32.mrf.mxu0
        %2299 = vdwg.mxu0
        %2300 = vst [vmem:[%s588] sm:$0x1] %v2297
        %s2301 = sand.u32 %s319, 1
        %s2302 = scalar_lea.sflag [#allocation5], %s2301
        %s2303 = sand.u32 %s319, 1
        %s2304 = scalar_lea.vmem [#allocation20], %s2303
        // Predicated region
        $region113: #{network_forward.1} parent=71 // pred_check
          %p2305 = pneg %p329
        $region114: #{network_forward.1} parent=71 // pred_check_branch
          %2307 = sbr.rel (%p2305) target = $region116
        $region115: #{network_forward.1} parent=71 // pred_region
          %2309 = vsyncadd %s2302, 0
          %s2310 = scalar_lea.hbm %s13, %s33
          %s2312 = sshll.u32 %s2304, 4
          %s2313 = int_to_ptr.vmem [resolvable:$true] %s2312
          %s2314 = sshll.u32 %s2310, 4
          %s2315 = int_to_ptr.hbm [resolvable:$true] %s2314
          %2317 = dma.vmem_to_hbm [thread:$0]  %s2313, 16, %s2315, %s2302
        $region116: #{network_forward.1} parent=71 // pred_fallthru
          _
      $region72: #{network_forward.1} parent=5 // pred_fallthru
        _
      %p2318 = scmp.le.s32.totalorder 2, %s28
      // Predicated region
      $region117: #{network_forward.1} parent=5 // pred_check
        %p2319 = pneg %p2318
      $region118: #{network_forward.1} parent=5 // pred_check_branch
        %2321 = sbr.rel (%p2319) target = $region120
      $region119: #{network_forward.1} parent=5 // pred_region
        %s2322 = ssub.s32 %s28, 2
        // Predicated region
        $region121: #{network_forward.1} parent=119 // pred_check
          %p2323 = pneg %p335
        $region122: #{network_forward.1} parent=119 // pred_check_branch
          %2325 = sbr.rel (%p2323) target = $region124
        $region123: #{network_forward.1} parent=119 // pred_region
          %s2326 = sand.u32 %s320, 1
          %s2327 = scalar_lea.sflag [#allocation5], %s2326
          %s2328 = sand.u32 %s320, 1
          %s2329 = scalar_lea.vmem [#allocation20], %s2328
          %2331 = dma.done %s2327, 16
        $region124: #{network_forward.1} parent=119 // pred_fallthru
          _
      $region120: #{network_forward.1} parent=5 // pred_fallthru
        _
    $region6: #{network_forward.1} parent=1 // loop_footer
      %s32 = sadd.s32 1, %s28
    $region7: #{network_forward.1} parent=1 // loop_footer_branch
      %27 = sbr.rel target = $region3
    $region8: #{network_forward.1} parent=1 // loop_exit
      _
    %2332 = vsyncpa [#allocation4], 1
    %s2333 = scalar_lea.sflag [#allocation4], 1
    %2334 = vsyncpa %s2333, 1
    %2335 = vsyncpa [#allocation7], 1
    %2336 = vsyncpa [#allocation10], 1
    %2337 = vsyncpa [#allocation13], 1
    %2338 = vsyncpa [#allocation16], 1
    %2339 = vsyncpa [#allocation19], 1
    %2340 = vsyncpa [#allocation5], 1
    %s2341 = scalar_lea.sflag [#allocation5], 1
    %2342 = vsyncpa %s2341, 1

</llo_original>
